<compile_context>
chip_gen: v5e
topology: v5e:2x2
jax: 0.10.0
libtpu: 0.0.40
codegen_flags: <defaults>
</compile_context>

<pallas_src>
import jax
import jax.numpy as jnp
from jax import lax
from jax.experimental import pallas as pl
from jax.experimental.pallas import tpu as pltpu


# Geometry implied by the PyTorch module (fc1 = 16*5*5  ->  1x28x28 input).
_H = 28                  # input spatial size
_HP = 14                 # phase-image size (28/2); flat row pitch used throughout
_P1 = 13                 # pool1 spatial (26 // 2)
_C2 = 11                 # conv2 spatial (13 - 2)
_P2 = 5                  # pool2 spatial (11 // 2)

_L1 = (_P1 - 1) * _HP + _P1                        # 181 : flat-14 span of a 13x13 map
_L2 = (_C2 - 1) * _HP + _C2                        # 151 : flat-14 span of an 11x11 map
_SEL2 = 2 * (_P2 - 1) * _HP + 2 * (_P2 - 1) + 1    # 121 : span of pool2 anchor positions
_PHS = 256               # lane stride between the 4 conv1 output phases


# ----------------------------------------------------------------------------
# The single fused kernel (one grid step == one sample)
# ----------------------------------------------------------------------------
def _lenet_kernel(x_ref, w1_ref, b1_ref, w2_ref, b2_ref,
                  f1w_ref, f1b_ref, f2w_ref, f2b_ref, f3w_ref, f3b_ref,
                  o_ref,
                  taps1_ref, taps2_ref, p2_ref, p2f_ref):
    f32 = jnp.float32
    xv = x_ref[...]                                  # [4, 196] stride-2 phase-split input

    # ---- conv1 (3x3, 1->6) + ReLU + 2x2/2 max-pool, via phase decomposition ----
    # conv1 output pixel (2u+pa, 2v+pb) only ever feeds pool1 output (u, v), so the
    # four output parity phases are computed side by side on the lane axis (phase
    # pab at lanes [pab*256, pab*256+181), spatial index u*14+v) with ONE K=9 MXU
    # matmul; the pool is an elementwise max of the four aligned lane slices.
    # Each tap of each output phase is a plain contiguous slice of one input phase.
    for pab, (pa, pb) in enumerate(((0, 0), (0, 1), (1, 0), (1, 1))):
        base = pab * _PHS
        for kh in range(3):
            for kw in range(3):
                k = kh * 3 + kw
                src = ((pa + kh) % 2) * 2 + ((pb + kw) % 2)
                off = ((pa + kh) // 2) * _HP + ((pb + kw) // 2)   # 0 / 1 / 14 / 15
                taps1_ref[k:k + 1, base:base + _L1] = xv[src:src + 1, off:off + _L1]

    z1 = jnp.dot(w1_ref[...], taps1_ref[0:9, :], preferred_element_type=f32)  # [8,1024]
    mx1 = jnp.maximum(jnp.maximum(z1[:, 0:_L1], z1[:, _PHS:_PHS + _L1]),
                      jnp.maximum(z1[:, 2 * _PHS:2 * _PHS + _L1],
                                  z1[:, 3 * _PHS:3 * _PHS + _L1]))
    pool1 = jnp.maximum(mx1 + b1_ref[...], 0.0)      # [8, 181]; rows 6,7 are exact zeros

    # ---- conv2 (3x3, 6->16) + ReLU : one K=72 tap-stacked MXU matmul ----
    # Tap rows sit at aligned sublane offsets k*8 (6 real channels + 2 zero rows,
    # matched by zero columns of w2), so every store/load stays (8,128)-friendly.
    for kh in range(3):
        for kw in range(3):
            k = kh * 3 + kw
            off = kh * _HP + kw
            taps2_ref[k * 8:(k + 1) * 8, 0:_L2] = pool1[:, off:off + _L2]
    y2 = jnp.maximum(jnp.dot(w2_ref[...], taps2_ref[...],
                             preferred_element_type=f32) + b2_ref[...], 0.0)   # [16,256]

    # ---- pool2 (2x2/2) + PyTorch (C,H,W) flatten ----
    m2 = jnp.maximum(jnp.maximum(y2[:, 0:_SEL2], y2[:, 1:1 + _SEL2]),
                     jnp.maximum(y2[:, _HP:_HP + _SEL2],
                                 y2[:, _HP + 1:_HP + 1 + _SEL2]))             # [16, 121]
    # Tiny [121,25] one-hot picking the 25 stride-2 pool anchors, generated
    # in-kernel from iotas (no HBM constant, no integer division).
    jj = lax.broadcasted_iota(jnp.int32, (_SEL2, _P2 * _P2), 0)
    tt = lax.broadcasted_iota(jnp.int32, (_SEL2, _P2 * _P2), 1)
    ph = ((tt >= 5).astype(jnp.int32) + (tt >= 10).astype(jnp.int32)
          + (tt >= 15).astype(jnp.int32) + (tt >= 20).astype(jnp.int32))
    pw = tt - 5 * ph
    sel2 = (jj == 2 * _HP * ph + 2 * pw).astype(f32)                          # [121, 25]
    p2_ref[:, 0:_P2 * _P2] = jnp.dot(m2, sel2, preferred_element_type=f32)    # [16, 25]

    # Scatter the 16 channel rows into one lane-dense [1, 400] row in PyTorch
    # (c, h, w) flatten order, so fc1 becomes a single K=400 matmul.
    for c in range(16):
        p2f_ref[0:1, c * 25:(c + 1) * 25] = p2_ref[c:c + 1, 0:_P2 * _P2]

    # ---- fc1 (+ReLU), fc2 (+ReLU), fc3  (bf16 weights, f32 accumulation) ----
    h = p2f_ref[0:1, 0:400]
    h = jnp.maximum(jnp.dot(h, f1w_ref[...].astype(f32),
                            preferred_element_type=f32) + f1b_ref[...], 0.0)
    h = jnp.maximum(jnp.dot(h, f2w_ref[...].astype(f32),
                            preferred_element_type=f32) + f2b_ref[...], 0.0)
    o_ref[...] = (jnp.dot(h, f3w_ref[...].astype(f32),
                          preferred_element_type=f32) + f3b_ref[...])


# ----------------------------------------------------------------------------
# Wrapper: layout prep (phase split / [Cout,K] weights / bf16 cast) + pallas_call
# ----------------------------------------------------------------------------
def lenet_forward(params, x_nchw):
    B = x_nchw.shape[0]
    f32, bf16 = jnp.float32, jnp.bfloat16

    # Input: stride-2 phase split (space-to-depth), done once by XLA outside the
    # kernel:  xp[b, 2*a + c, u*14 + v] = x[b, 0, 2*u + a, 2*v + c].
    xp = (x_nchw.astype(f32).reshape(B, _HP, 2, _HP, 2)
          .transpose(0, 2, 4, 1, 3).reshape(B, 4, _HP * _HP))

    # Conv weights in [Cout, K] layout (taps stacked along K for one matmul each).
    # Rows/cols are padded to 8-granules; all pad entries are exactly zero.
    w1c = jnp.pad(params["conv1_w"].reshape(9, 6).T, ((0, 2), (0, 0))).astype(f32)  # [8, 9]
    w2c = params["conv2_w"].reshape(54, 16).T                                       # [16,54], col = k*6+ci
    w2c = jnp.pad(w2c.reshape(16, 9, 6), ((0, 0), (0, 0), (0, 2))).reshape(16, 72).astype(f32)
    b1 = jnp.pad(params["conv1_b"].reshape(6, 1), ((0, 2), (0, 0))).astype(f32)     # [8, 1]
    b2 = params["conv2_b"].reshape(16, 1).astype(f32)

    # FC weights are essentially all the weight bytes -> ship as bf16 (halves the
    # weight DMA); accumulation stays f32 inside the kernel.
    f1w = params["fc1_w"].astype(bf16)                 # [400, 120], rows already (c,h,w) order
    f2w = params["fc2_w"].astype(bf16)                 # [120, 84]
    f3w = params["fc3_w"].astype(bf16)                 # [84, 10]
    f1b = params["fc1_b"].reshape(1, 120).astype(f32)
    f2b = params["fc2_b"].reshape(1, 84).astype(f32)
    f3b = params["fc3_b"].reshape(1, 10).astype(f32)

    def const_spec(arr):
        nd = arr.ndim
        return pl.BlockSpec(arr.shape, lambda b, nd=nd: (0,) * nd)

    weights = (w1c, b1, w2c, b2, f1w, f1b, f2w, f2b, f3w, f3b)

    out = pl.pallas_call(
        _lenet_kernel,
        out_shape=jax.ShapeDtypeStruct((B, 1, 10), f32),
        grid=(B,),
        in_specs=[pl.BlockSpec((None, 4, _HP * _HP), lambda b: (b, 0, 0))]
                 + [const_spec(a) for a in weights],
        out_specs=pl.BlockSpec((None, 1, 10), lambda b: (b, 0, 0)),
        scratch_shapes=[
            pltpu.VMEM((16, 4 * _PHS), f32),   # conv1 tap stack: 9 taps x (4 phases on lanes)
            pltpu.VMEM((72, 256), f32),        # conv2 tap stack: 9 taps x 8-row channel blocks
            pltpu.VMEM((16, 128), f32),        # pool2 output [16, 25]
            pltpu.VMEM((8, 512), f32),         # pool2 flattened to (c,h,w) order [1, 400]
        ],
        # grid=(B,) "parallel": one sample per TensorCore on v7x.  Weight blocks
        # have constant index maps so they are DMA'd once; total VMEM footprint is
        # a few hundred KB, well under every generation's default scoped limit, so
        # no vmem_limit bump or special (de-)buffering of the constants is needed.
        compiler_params=pltpu.CompilerParams(
            dimension_semantics=("parallel",)),
    )(xp, *weights)
    return out.reshape(B, 10)


# ----------------------------------------------------------------------------
# Pure-JAX reference (self-check) and deterministic parameter init
# ----------------------------------------------------------------------------
def lenet_reference(params, x):
    dn = ('NCHW', 'HWIO', 'NCHW')
    y = lax.conv_general_dilated(x, params["conv1_w"], (1, 1), 'VALID',
                                 dimension_numbers=dn)
    y = jax.nn.relu(y + params["conv1_b"].reshape(1, 6, 1, 1))
    y = lax.reduce_window(y, -jnp.inf, lax.max, (1, 1, 2, 2), (1, 1, 2, 2), 'VALID')
    y = lax.conv_general_dilated(y, params["conv2_w"], (1, 1), 'VALID',
                                 dimension_numbers=dn)
    y = jax.nn.relu(y + params["conv2_b"].reshape(1, 16, 1, 1))
    y = lax.reduce_window(y, -jnp.inf, lax.max, (1, 1, 2, 2), (1, 1, 2, 2), 'VALID')
    y = y.reshape(y.shape[0], -1)                       # PyTorch .view -> (C,H,W) order
    y = jax.nn.relu(y @ params["fc1_w"] + params["fc1_b"])
    y = jax.nn.relu(y @ params["fc2_w"] + params["fc2_b"])
    return y @ params["fc3_w"] + params["fc3_b"]


def init_params(key):
    def uni(k, shape, fan_in):
        bound = 1.0 / jnp.sqrt(jnp.float32(fan_in))
        return jax.random.uniform(k, shape, jnp.float32, -bound, bound)

    ks = jax.random.split(key, 10)
    return {
        # conv weights stored as [kh, kw, cin, cout]
        "conv1_w": uni(ks[0], (3, 3, 1, 6), 1 * 3 * 3),
        "conv1_b": uni(ks[1], (6,), 1 * 3 * 3),
        "conv2_w": uni(ks[2], (3, 3, 6, 16), 6 * 3 * 3),
        "conv2_b": uni(ks[3], (16,), 6 * 3 * 3),
        # fc weights stored as [in, out]; fc1 rows indexed in PyTorch (c,h,w) order
        "fc1_w": uni(ks[4], (16 * 5 * 5, 120), 16 * 5 * 5),
        "fc1_b": uni(ks[5], (120,), 16 * 5 * 5),
        "fc2_w": uni(ks[6], (120, 84), 120),
        "fc2_b": uni(ks[7], (84,), 120),
        "fc3_w": uni(ks[8], (84, 10), 84),
        "fc3_b": uni(ks[9], (10,), 84),
    }


if __name__ == "__main__":
    key = jax.random.PRNGKey(0)
    k_params, k_x = jax.random.split(key)

    params = init_params(k_params)
    # LeNet geometry (fc1 = 16*5*5) implies 28x28 single-channel input.
    x = jax.random.normal(k_x, (2, 1, 28, 28), dtype=jnp.float32)

    out = jax.block_until_ready(jax.jit(lenet_forward)(params, x))
    assert out.shape == (2, 10) and out.dtype == jnp.float32

    ref = jax.block_until_ready(jax.jit(lenet_reference)(params, x))
    err = float(jnp.max(jnp.abs(out - ref)))
    # bf16 fc-weight quantization keeps the kernel/reference gap well below 2e-2.
    assert err < 2e-2, f"kernel/reference mismatch: max abs err = {err}"

    print("KERNEL_OK")
</pallas_src>

<mosaic_0001>
module attributes {stable_mosaic.version = 11 : i64} {
  func.func @_lenet_kernel(%arg0: i32, %arg1: memref<1x4x196xf32, #tpu.memory_space<vmem>>, %arg2: memref<8x9xf32, #tpu.memory_space<vmem>>, %arg3: memref<8x1xf32, #tpu.memory_space<vmem>>, %arg4: memref<16x72xf32, #tpu.memory_space<vmem>>, %arg5: memref<16x1xf32, #tpu.memory_space<vmem>>, %arg6: memref<400x120xbf16, #tpu.memory_space<vmem>>, %arg7: memref<1x120xf32, #tpu.memory_space<vmem>>, %arg8: memref<120x84xbf16, #tpu.memory_space<vmem>>, %arg9: memref<1x84xf32, #tpu.memory_space<vmem>>, %arg10: memref<84x10xbf16, #tpu.memory_space<vmem>>, %arg11: memref<1x10xf32, #tpu.memory_space<vmem>>, %arg12: memref<1x1x10xf32, #tpu.memory_space<vmem>>, %arg13: memref<16x1024xf32, #tpu.memory_space<vmem>>, %arg14: memref<72x256xf32, #tpu.memory_space<vmem>>, %arg15: memref<16x128xf32, #tpu.memory_space<vmem>>, %arg16: memref<8x512xf32, #tpu.memory_space<vmem>>) attributes {dimension_semantics = [#tpu.dimension_semantics<parallel>], iteration_bounds = array<i64: 2>, scalar_prefetch = 0 : i64, scratch_operands = 4 : i64, tpu.core_type = #tpu.core_type<tc>, window_params = [{transform_indices = @transform_0, window_bounds = array<i64: 1, 4, 196>}, {pipeline_mode = #tpu.pipeline_mode<synchronous>, transform_indices = @transform_1, window_bounds = array<i64: 8, 9>}, {pipeline_mode = #tpu.pipeline_mode<synchronous>, transform_indices = @transform_2, window_bounds = array<i64: 8, 1>}, {pipeline_mode = #tpu.pipeline_mode<synchronous>, transform_indices = @transform_3, window_bounds = array<i64: 16, 72>}, {pipeline_mode = #tpu.pipeline_mode<synchronous>, transform_indices = @transform_4, window_bounds = array<i64: 16, 1>}, {pipeline_mode = #tpu.pipeline_mode<synchronous>, transform_indices = @transform_5, window_bounds = array<i64: 400, 120>}, {pipeline_mode = #tpu.pipeline_mode<synchronous>, transform_indices = @transform_6, window_bounds = array<i64: 1, 120>}, {pipeline_mode = #tpu.pipeline_mode<synchronous>, transform_indices = @transform_7, window_bounds = array<i64: 120, 84>}, {pipeline_mode = #tpu.pipeline_mode<synchronous>, transform_indices = @transform_8, window_bounds = array<i64: 1, 84>}, {pipeline_mode = #tpu.pipeline_mode<synchronous>, transform_indices = @transform_9, window_bounds = array<i64: 84, 10>}, {pipeline_mode = #tpu.pipeline_mode<synchronous>, transform_indices = @transform_10, window_bounds = array<i64: 1, 10>}, {transform_indices = @transform_11, window_bounds = array<i64: 1, 1, 10>}]} {
    %c0 = arith.constant 0 : index
    %c0_0 = arith.constant 0 : index
    %c0_1 = arith.constant 0 : index
    %0 = vector.load %arg1[%c0, %c0_0, %c0_1] : memref<1x4x196xf32, #tpu.memory_space<vmem>>, vector<1x4x196xf32>
    %1 = vector.shape_cast %0 : vector<1x4x196xf32> to vector<4x196xf32>
    %2 = vector.extract_strided_slice %1 {offsets = [0, 0], sizes = [1, 181], strides = [1, 1]} : vector<4x196xf32> to vector<1x181xf32>
    %c0_2 = arith.constant 0 : index
    %c0_3 = arith.constant 0 : index
    %3 = vector.load %arg13[%c0_2, %c0_3] : memref<16x1024xf32, #tpu.memory_space<vmem>>, vector<1x181xf32>
    tpu.vector_store %arg13[%c0_2, %c0_3], %2 {strides = array<i32>} : memref<16x1024xf32, #tpu.memory_space<vmem>>, vector<1x181xf32>,
    %4 = vector.extract_strided_slice %1 {offsets = [1, 0], sizes = [1, 181], strides = [1, 1]} : vector<4x196xf32> to vector<1x181xf32>
    %c1 = arith.constant 1 : index
    %c0_4 = arith.constant 0 : index
    %5 = vector.load %arg13[%c1, %c0_4] : memref<16x1024xf32, #tpu.memory_space<vmem>>, vector<1x181xf32>
    tpu.vector_store %arg13[%c1, %c0_4], %4 {strides = array<i32>} : memref<16x1024xf32, #tpu.memory_space<vmem>>, vector<1x181xf32>,
    %6 = vector.extract_strided_slice %1 {offsets = [0, 1], sizes = [1, 181], strides = [1, 1]} : vector<4x196xf32> to vector<1x181xf32>
    %c2 = arith.constant 2 : index
    %c0_5 = arith.constant 0 : index
    %7 = vector.load %arg13[%c2, %c0_5] : memref<16x1024xf32, #tpu.memory_space<vmem>>, vector<1x181xf32>
    tpu.vector_store %arg13[%c2, %c0_5], %6 {strides = array<i32>} : memref<16x1024xf32, #tpu.memory_space<vmem>>, vector<1x181xf32>,
    %8 = vector.extract_strided_slice %1 {offsets = [2, 0], sizes = [1, 181], strides = [1, 1]} : vector<4x196xf32> to vector<1x181xf32>
    %c3 = arith.constant 3 : index
    %c0_6 = arith.constant 0 : index
    %9 = vector.load %arg13[%c3, %c0_6] : memref<16x1024xf32, #tpu.memory_space<vmem>>, vector<1x181xf32>
    tpu.vector_store %arg13[%c3, %c0_6], %8 {strides = array<i32>} : memref<16x1024xf32, #tpu.memory_space<vmem>>, vector<1x181xf32>,
    %10 = vector.extract_strided_slice %1 {offsets = [3, 0], sizes = [1, 181], strides = [1, 1]} : vector<4x196xf32> to vector<1x181xf32>
    %c4 = arith.constant 4 : index
    %c0_7 = arith.constant 0 : index
    %11 = vector.load %arg13[%c4, %c0_7] : memref<16x1024xf32, #tpu.memory_space<vmem>>, vector<1x181xf32>
    tpu.vector_store %arg13[%c4, %c0_7], %10 {strides = array<i32>} : memref<16x1024xf32, #tpu.memory_space<vmem>>, vector<1x181xf32>,
    %12 = vector.extract_strided_slice %1 {offsets = [2, 1], sizes = [1, 181], strides = [1, 1]} : vector<4x196xf32> to vector<1x181xf32>
    %c5 = arith.constant 5 : index
    %c0_8 = arith.constant 0 : index
    %13 = vector.load %arg13[%c5, %c0_8] : memref<16x1024xf32, #tpu.memory_space<vmem>>, vector<1x181xf32>
    tpu.vector_store %arg13[%c5, %c0_8], %12 {strides = array<i32>} : memref<16x1024xf32, #tpu.memory_space<vmem>>, vector<1x181xf32>,
    %14 = vector.extract_strided_slice %1 {offsets = [0, 14], sizes = [1, 181], strides = [1, 1]} : vector<4x196xf32> to vector<1x181xf32>
    %c6 = arith.constant 6 : index
    %c0_9 = arith.constant 0 : index
    %15 = vector.load %arg13[%c6, %c0_9] : memref<16x1024xf32, #tpu.memory_space<vmem>>, vector<1x181xf32>
    tpu.vector_store %arg13[%c6, %c0_9], %14 {strides = array<i32>} : memref<16x1024xf32, #tpu.memory_space<vmem>>, vector<1x181xf32>,
    %16 = vector.extract_strided_slice %1 {offsets = [1, 14], sizes = [1, 181], strides = [1, 1]} : vector<4x196xf32> to vector<1x181xf32>
    %c7 = arith.constant 7 : index
    %c0_10 = arith.constant 0 : index
    %17 = vector.load %arg13[%c7, %c0_10] : memref<16x1024xf32, #tpu.memory_space<vmem>>, vector<1x181xf32>
    tpu.vector_store %arg13[%c7, %c0_10], %16 {strides = array<i32>} : memref<16x1024xf32, #tpu.memory_space<vmem>>, vector<1x181xf32>,
    %18 = vector.extract_strided_slice %1 {offsets = [0, 15], sizes = [1, 181], strides = [1, 1]} : vector<4x196xf32> to vector<1x181xf32>
    %c8 = arith.constant 8 : index
    %c0_11 = arith.constant 0 : index
    %19 = vector.load %arg13[%c8, %c0_11] : memref<16x1024xf32, #tpu.memory_space<vmem>>, vector<1x181xf32>
    tpu.vector_store %arg13[%c8, %c0_11], %18 {strides = array<i32>} : memref<16x1024xf32, #tpu.memory_space<vmem>>, vector<1x181xf32>,
    %20 = vector.extract_strided_slice %1 {offsets = [1, 0], sizes = [1, 181], strides = [1, 1]} : vector<4x196xf32> to vector<1x181xf32>
    %c0_12 = arith.constant 0 : index
    %c256 = arith.constant 256 : index
    %21 = vector.load %arg13[%c0_12, %c256] : memref<16x1024xf32, #tpu.memory_space<vmem>>, vector<1x181xf32>
    tpu.vector_store %arg13[%c0_12, %c256], %20 {strides = array<i32>} : memref<16x1024xf32, #tpu.memory_space<vmem>>, vector<1x181xf32>,
    %22 = vector.extract_strided_slice %1 {offsets = [0, 1], sizes = [1, 181], strides = [1, 1]} : vector<4x196xf32> to vector<1x181xf32>
    %c1_13 = arith.constant 1 : index
    %c256_14 = arith.constant 256 : index
    %23 = vector.load %arg13[%c1_13, %c256_14] : memref<16x1024xf32, #tpu.memory_space<vmem>>, vector<1x181xf32>
    tpu.vector_store %arg13[%c1_13, %c256_14], %22 {strides = array<i32>} : memref<16x1024xf32, #tpu.memory_space<vmem>>, vector<1x181xf32>,
    %24 = vector.extract_strided_slice %1 {offsets = [1, 1], sizes = [1, 181], strides = [1, 1]} : vector<4x196xf32> to vector<1x181xf32>
    %c2_15 = arith.constant 2 : index
    %c256_16 = arith.constant 256 : index
    %25 = vector.load %arg13[%c2_15, %c256_16] : memref<16x1024xf32, #tpu.memory_space<vmem>>, vector<1x181xf32>
    tpu.vector_store %arg13[%c2_15, %c256_16], %24 {strides = array<i32>} : memref<16x1024xf32, #tpu.memory_space<vmem>>, vector<1x181xf32>,
    %26 = vector.extract_strided_slice %1 {offsets = [3, 0], sizes = [1, 181], strides = [1, 1]} : vector<4x196xf32> to vector<1x181xf32>
    %c3_17 = arith.constant 3 : index
    %c256_18 = arith.constant 256 : index
    %27 = vector.load %arg13[%c3_17, %c256_18] : memref<16x1024xf32, #tpu.memory_space<vmem>>, vector<1x181xf32>
    tpu.vector_store %arg13[%c3_17, %c256_18], %26 {strides = array<i32>} : memref<16x1024xf32, #tpu.memory_space<vmem>>, vector<1x181xf32>,
    %28 = vector.extract_strided_slice %1 {offsets = [2, 1], sizes = [1, 181], strides = [1, 1]} : vector<4x196xf32> to vector<1x181xf32>
    %c4_19 = arith.constant 4 : index
    %c256_20 = arith.constant 256 : index
    %29 = vector.load %arg13[%c4_19, %c256_20] : memref<16x1024xf32, #tpu.memory_space<vmem>>, vector<1x181xf32>
    tpu.vector_store %arg13[%c4_19, %c256_20], %28 {strides = array<i32>} : memref<16x1024xf32, #tpu.memory_space<vmem>>, vector<1x181xf32>,
    %30 = vector.extract_strided_slice %1 {offsets = [3, 1], sizes = [1, 181], strides = [1, 1]} : vector<4x196xf32> to vector<1x181xf32>
    %c5_21 = arith.constant 5 : index
    %c256_22 = arith.constant 256 : index
    %31 = vector.load %arg13[%c5_21, %c256_22] : memref<16x1024xf32, #tpu.memory_space<vmem>>, vector<1x181xf32>
    tpu.vector_store %arg13[%c5_21, %c256_22], %30 {strides = array<i32>} : memref<16x1024xf32, #tpu.memory_space<vmem>>, vector<1x181xf32>,
    %32 = vector.extract_strided_slice %1 {offsets = [1, 14], sizes = [1, 181], strides = [1, 1]} : vector<4x196xf32> to vector<1x181xf32>
    %c6_23 = arith.constant 6 : index
    %c256_24 = arith.constant 256 : index
    %33 = vector.load %arg13[%c6_23, %c256_24] : memref<16x1024xf32, #tpu.memory_space<vmem>>, vector<1x181xf32>
    tpu.vector_store %arg13[%c6_23, %c256_24], %32 {strides = array<i32>} : memref<16x1024xf32, #tpu.memory_space<vmem>>, vector<1x181xf32>,
    %34 = vector.extract_strided_slice %1 {offsets = [0, 15], sizes = [1, 181], strides = [1, 1]} : vector<4x196xf32> to vector<1x181xf32>
    %c7_25 = arith.constant 7 : index
    %c256_26 = arith.constant 256 : index
    %35 = vector.load %arg13[%c7_25, %c256_26] : memref<16x1024xf32, #tpu.memory_space<vmem>>, vector<1x181xf32>
    tpu.vector_store %arg13[%c7_25, %c256_26], %34 {strides = array<i32>} : memref<16x1024xf32, #tpu.memory_space<vmem>>, vector<1x181xf32>,
    %36 = vector.extract_strided_slice %1 {offsets = [1, 15], sizes = [1, 181], strides = [1, 1]} : vector<4x196xf32> to vector<1x181xf32>
    %c8_27 = arith.constant 8 : index
    %c256_28 = arith.constant 256 : index
    %37 = vector.load %arg13[%c8_27, %c256_28] : memref<16x1024xf32, #tpu.memory_space<vmem>>, vector<1x181xf32>
    tpu.vector_store %arg13[%c8_27, %c256_28], %36 {strides = array<i32>} : memref<16x1024xf32, #tpu.memory_space<vmem>>, vector<1x181xf32>,
    %38 = vector.extract_strided_slice %1 {offsets = [2, 0], sizes = [1, 181], strides = [1, 1]} : vector<4x196xf32> to vector<1x181xf32>
    %c0_29 = arith.constant 0 : index
    %c512 = arith.constant 512 : index
    %39 = vector.load %arg13[%c0_29, %c512] : memref<16x1024xf32, #tpu.memory_space<vmem>>, vector<1x181xf32>
    tpu.vector_store %arg13[%c0_29, %c512], %38 {strides = array<i32>} : memref<16x1024xf32, #tpu.memory_space<vmem>>, vector<1x181xf32>,
    %40 = vector.extract_strided_slice %1 {offsets = [3, 0], sizes = [1, 181], strides = [1, 1]} : vector<4x196xf32> to vector<1x181xf32>
    %c1_30 = arith.constant 1 : index
    %c512_31 = arith.constant 512 : index
    %41 = vector.load %arg13[%c1_30, %c512_31] : memref<16x1024xf32, #tpu.memory_space<vmem>>, vector<1x181xf32>
    tpu.vector_store %arg13[%c1_30, %c512_31], %40 {strides = array<i32>} : memref<16x1024xf32, #tpu.memory_space<vmem>>, vector<1x181xf32>,
    %42 = vector.extract_strided_slice %1 {offsets = [2, 1], sizes = [1, 181], strides = [1, 1]} : vector<4x196xf32> to vector<1x181xf32>
    %c2_32 = arith.constant 2 : index
    %c512_33 = arith.constant 512 : index
    %43 = vector.load %arg13[%c2_32, %c512_33] : memref<16x1024xf32, #tpu.memory_space<vmem>>, vector<1x181xf32>
    tpu.vector_store %arg13[%c2_32, %c512_33], %42 {strides = array<i32>} : memref<16x1024xf32, #tpu.memory_space<vmem>>, vector<1x181xf32>,
    %44 = vector.extract_strided_slice %1 {offsets = [0, 14], sizes = [1, 181], strides = [1, 1]} : vector<4x196xf32> to vector<1x181xf32>
    %c3_34 = arith.constant 3 : index
    %c512_35 = arith.constant 512 : index
    %45 = vector.load %arg13[%c3_34, %c512_35] : memref<16x1024xf32, #tpu.memory_space<vmem>>, vector<1x181xf32>
    tpu.vector_store %arg13[%c3_34, %c512_35], %44 {strides = array<i32>} : memref<16x1024xf32, #tpu.memory_space<vmem>>, vector<1x181xf32>,
    %46 = vector.extract_strided_slice %1 {offsets = [1, 14], sizes = [1, 181], strides = [1, 1]} : vector<4x196xf32> to vector<1x181xf32>
    %c4_36 = arith.constant 4 : index
    %c512_37 = arith.constant 512 : index
    %47 = vector.load %arg13[%c4_36, %c512_37] : memref<16x1024xf32, #tpu.memory_space<vmem>>, vector<1x181xf32>
    tpu.vector_store %arg13[%c4_36, %c512_37], %46 {strides = array<i32>} : memref<16x1024xf32, #tpu.memory_space<vmem>>, vector<1x181xf32>,
    %48 = vector.extract_strided_slice %1 {offsets = [0, 15], sizes = [1, 181], strides = [1, 1]} : vector<4x196xf32> to vector<1x181xf32>
    %c5_38 = arith.constant 5 : index
    %c512_39 = arith.constant 512 : index
    %49 = vector.load %arg13[%c5_38, %c512_39] : memref<16x1024xf32, #tpu.memory_space<vmem>>, vector<1x181xf32>
    tpu.vector_store %arg13[%c5_38, %c512_39], %48 {strides = array<i32>} : memref<16x1024xf32, #tpu.memory_space<vmem>>, vector<1x181xf32>,
    %50 = vector.extract_strided_slice %1 {offsets = [2, 14], sizes = [1, 181], strides = [1, 1]} : vector<4x196xf32> to vector<1x181xf32>
    %c6_40 = arith.constant 6 : index
    %c512_41 = arith.constant 512 : index
    %51 = vector.load %arg13[%c6_40, %c512_41] : memref<16x1024xf32, #tpu.memory_space<vmem>>, vector<1x181xf32>
    tpu.vector_store %arg13[%c6_40, %c512_41], %50 {strides = array<i32>} : memref<16x1024xf32, #tpu.memory_space<vmem>>, vector<1x181xf32>,
    %52 = vector.extract_strided_slice %1 {offsets = [3, 14], sizes = [1, 181], strides = [1, 1]} : vector<4x196xf32> to vector<1x181xf32>
    %c7_42 = arith.constant 7 : index
    %c512_43 = arith.constant 512 : index
    %53 = vector.load %arg13[%c7_42, %c512_43] : memref<16x1024xf32, #tpu.memory_space<vmem>>, vector<1x181xf32>
    tpu.vector_store %arg13[%c7_42, %c512_43], %52 {strides = array<i32>} : memref<16x1024xf32, #tpu.memory_space<vmem>>, vector<1x181xf32>,
    %54 = vector.extract_strided_slice %1 {offsets = [2, 15], sizes = [1, 181], strides = [1, 1]} : vector<4x196xf32> to vector<1x181xf32>
    %c8_44 = arith.constant 8 : index
    %c512_45 = arith.constant 512 : index
    %55 = vector.load %arg13[%c8_44, %c512_45] : memref<16x1024xf32, #tpu.memory_space<vmem>>, vector<1x181xf32>
    tpu.vector_store %arg13[%c8_44, %c512_45], %54 {strides = array<i32>} : memref<16x1024xf32, #tpu.memory_space<vmem>>, vector<1x181xf32>,
    %56 = vector.extract_strided_slice %1 {offsets = [3, 0], sizes = [1, 181], strides = [1, 1]} : vector<4x196xf32> to vector<1x181xf32>
    %c0_46 = arith.constant 0 : index
    %c768 = arith.constant 768 : index
    %57 = vector.load %arg13[%c0_46, %c768] : memref<16x1024xf32, #tpu.memory_space<vmem>>, vector<1x181xf32>
    tpu.vector_store %arg13[%c0_46, %c768], %56 {strides = array<i32>} : memref<16x1024xf32, #tpu.memory_space<vmem>>, vector<1x181xf32>,
    %58 = vector.extract_strided_slice %1 {offsets = [2, 1], sizes = [1, 181], strides = [1, 1]} : vector<4x196xf32> to vector<1x181xf32>
    %c1_47 = arith.constant 1 : index
    %c768_48 = arith.constant 768 : index
    %59 = vector.load %arg13[%c1_47, %c768_48] : memref<16x1024xf32, #tpu.memory_space<vmem>>, vector<1x181xf32>
    tpu.vector_store %arg13[%c1_47, %c768_48], %58 {strides = array<i32>} : memref<16x1024xf32, #tpu.memory_space<vmem>>, vector<1x181xf32>,
    %60 = vector.extract_strided_slice %1 {offsets = [3, 1], sizes = [1, 181], strides = [1, 1]} : vector<4x196xf32> to vector<1x181xf32>
    %c2_49 = arith.constant 2 : index
    %c768_50 = arith.constant 768 : index
    %61 = vector.load %arg13[%c2_49, %c768_50] : memref<16x1024xf32, #tpu.memory_space<vmem>>, vector<1x181xf32>
    tpu.vector_store %arg13[%c2_49, %c768_50], %60 {strides = array<i32>} : memref<16x1024xf32, #tpu.memory_space<vmem>>, vector<1x181xf32>,
    %62 = vector.extract_strided_slice %1 {offsets = [1, 14], sizes = [1, 181], strides = [1, 1]} : vector<4x196xf32> to vector<1x181xf32>
    %c3_51 = arith.constant 3 : index
    %c768_52 = arith.constant 768 : index
    %63 = vector.load %arg13[%c3_51, %c768_52] : memref<16x1024xf32, #tpu.memory_space<vmem>>, vector<1x181xf32>
    tpu.vector_store %arg13[%c3_51, %c768_52], %62 {strides = array<i32>} : memref<16x1024xf32, #tpu.memory_space<vmem>>, vector<1x181xf32>,
    %64 = vector.extract_strided_slice %1 {offsets = [0, 15], sizes = [1, 181], strides = [1, 1]} : vector<4x196xf32> to vector<1x181xf32>
    %c4_53 = arith.constant 4 : index
    %c768_54 = arith.constant 768 : index
    %65 = vector.load %arg13[%c4_53, %c768_54] : memref<16x1024xf32, #tpu.memory_space<vmem>>, vector<1x181xf32>
    tpu.vector_store %arg13[%c4_53, %c768_54], %64 {strides = array<i32>} : memref<16x1024xf32, #tpu.memory_space<vmem>>, vector<1x181xf32>,
    %66 = vector.extract_strided_slice %1 {offsets = [1, 15], sizes = [1, 181], strides = [1, 1]} : vector<4x196xf32> to vector<1x181xf32>
    %c5_55 = arith.constant 5 : index
    %c768_56 = arith.constant 768 : index
    %67 = vector.load %arg13[%c5_55, %c768_56] : memref<16x1024xf32, #tpu.memory_space<vmem>>, vector<1x181xf32>
    tpu.vector_store %arg13[%c5_55, %c768_56], %66 {strides = array<i32>} : memref<16x1024xf32, #tpu.memory_space<vmem>>, vector<1x181xf32>,
    %68 = vector.extract_strided_slice %1 {offsets = [3, 14], sizes = [1, 181], strides = [1, 1]} : vector<4x196xf32> to vector<1x181xf32>
    %c6_57 = arith.constant 6 : index
    %c768_58 = arith.constant 768 : index
    %69 = vector.load %arg13[%c6_57, %c768_58] : memref<16x1024xf32, #tpu.memory_space<vmem>>, vector<1x181xf32>
    tpu.vector_store %arg13[%c6_57, %c768_58], %68 {strides = array<i32>} : memref<16x1024xf32, #tpu.memory_space<vmem>>, vector<1x181xf32>,
    %70 = vector.extract_strided_slice %1 {offsets = [2, 15], sizes = [1, 181], strides = [1, 1]} : vector<4x196xf32> to vector<1x181xf32>
    %c7_59 = arith.constant 7 : index
    %c768_60 = arith.constant 768 : index
    %71 = vector.load %arg13[%c7_59, %c768_60] : memref<16x1024xf32, #tpu.memory_space<vmem>>, vector<1x181xf32>
    tpu.vector_store %arg13[%c7_59, %c768_60], %70 {strides = array<i32>} : memref<16x1024xf32, #tpu.memory_space<vmem>>, vector<1x181xf32>,
    %72 = vector.extract_strided_slice %1 {offsets = [3, 15], sizes = [1, 181], strides = [1, 1]} : vector<4x196xf32> to vector<1x181xf32>
    %c8_61 = arith.constant 8 : index
    %c768_62 = arith.constant 768 : index
    %73 = vector.load %arg13[%c8_61, %c768_62] : memref<16x1024xf32, #tpu.memory_space<vmem>>, vector<1x181xf32>
    tpu.vector_store %arg13[%c8_61, %c768_62], %72 {strides = array<i32>} : memref<16x1024xf32, #tpu.memory_space<vmem>>, vector<1x181xf32>,
    %c0_63 = arith.constant 0 : index
    %c0_64 = arith.constant 0 : index
    %74 = vector.load %arg2[%c0_63, %c0_64] : memref<8x9xf32, #tpu.memory_space<vmem>>, vector<8x9xf32>
    %c0_65 = arith.constant 0 : index
    %c0_66 = arith.constant 0 : index
    %75 = vector.load %arg13[%c0_65, %c0_66] : memref<16x1024xf32, #tpu.memory_space<vmem>>, vector<9x1024xf32>
    %cst = arith.constant dense<0.000000e+00> : vector<8x1024xf32>
    %76 = tpu.matmul %74, %75, %cst {dimension_numbers = #tpu.dot_dimension_numbers<[1], [0], [0], [1], [0, 0, 1, 1], [], []>} : vector<8x9xf32>, vector<9x1024xf32>, vector<8x1024xf32> -> vector<8x1024xf32>
    %77 = vector.extract_strided_slice %76 {offsets = [0, 0], sizes = [8, 181], strides = [1, 1]} : vector<8x1024xf32> to vector<8x181xf32>
    %78 = vector.extract_strided_slice %76 {offsets = [0, 256], sizes = [8, 181], strides = [1, 1]} : vector<8x1024xf32> to vector<8x181xf32>
    %79 = arith.maximumf %77, %78 : vector<8x181xf32>
    %80 = vector.extract_strided_slice %76 {offsets = [0, 512], sizes = [8, 181], strides = [1, 1]} : vector<8x1024xf32> to vector<8x181xf32>
    %81 = vector.extract_strided_slice %76 {offsets = [0, 768], sizes = [8, 181], strides = [1, 1]} : vector<8x1024xf32> to vector<8x181xf32>
    %82 = arith.maximumf %80, %81 : vector<8x181xf32>
    %83 = arith.maximumf %79, %82 : vector<8x181xf32>
    %c0_67 = arith.constant 0 : index
    %c0_68 = arith.constant 0 : index
    %84 = vector.load %arg3[%c0_67, %c0_68] : memref<8x1xf32, #tpu.memory_space<vmem>>, vector<8x1xf32>
    %85 = vector.broadcast %84 : vector<8x1xf32> to vector<8x181xf32>
    %86 = arith.addf %83, %85 : vector<8x181xf32>
    %cst_69 = arith.constant 0.000000e+00 : f32
    %87 = vector.broadcast %cst_69 : f32 to vector<8x181xf32>
    %88 = arith.maximumf %86, %87 : vector<8x181xf32>
    %89 = vector.extract_strided_slice %88 {offsets = [0, 0], sizes = [8, 151], strides = [1, 1]} : vector<8x181xf32> to vector<8x151xf32>
    %c0_70 = arith.constant 0 : index
    %c0_71 = arith.constant 0 : index
    %90 = vector.load %arg14[%c0_70, %c0_71] : memref<72x256xf32, #tpu.memory_space<vmem>>, vector<8x151xf32>
    tpu.vector_store %arg14[%c0_70, %c0_71], %89 {strides = array<i32>} : memref<72x256xf32, #tpu.memory_space<vmem>>, vector<8x151xf32>,
    %91 = vector.extract_strided_slice %88 {offsets = [0, 1], sizes = [8, 151], strides = [1, 1]} : vector<8x181xf32> to vector<8x151xf32>
    %c8_72 = arith.constant 8 : index
    %c0_73 = arith.constant 0 : index
    %92 = vector.load %arg14[%c8_72, %c0_73] : memref<72x256xf32, #tpu.memory_space<vmem>>, vector<8x151xf32>
    tpu.vector_store %arg14[%c8_72, %c0_73], %91 {strides = array<i32>} : memref<72x256xf32, #tpu.memory_space<vmem>>, vector<8x151xf32>,
    %93 = vector.extract_strided_slice %88 {offsets = [0, 2], sizes = [8, 151], strides = [1, 1]} : vector<8x181xf32> to vector<8x151xf32>
    %c16 = arith.constant 16 : index
    %c0_74 = arith.constant 0 : index
    %94 = vector.load %arg14[%c16, %c0_74] : memref<72x256xf32, #tpu.memory_space<vmem>>, vector<8x151xf32>
    tpu.vector_store %arg14[%c16, %c0_74], %93 {strides = array<i32>} : memref<72x256xf32, #tpu.memory_space<vmem>>, vector<8x151xf32>,
    %95 = vector.extract_strided_slice %88 {offsets = [0, 14], sizes = [8, 151], strides = [1, 1]} : vector<8x181xf32> to vector<8x151xf32>
    %c24 = arith.constant 24 : index
    %c0_75 = arith.constant 0 : index
    %96 = vector.load %arg14[%c24, %c0_75] : memref<72x256xf32, #tpu.memory_space<vmem>>, vector<8x151xf32>
    tpu.vector_store %arg14[%c24, %c0_75], %95 {strides = array<i32>} : memref<72x256xf32, #tpu.memory_space<vmem>>, vector<8x151xf32>,
    %97 = vector.extract_strided_slice %88 {offsets = [0, 15], sizes = [8, 151], strides = [1, 1]} : vector<8x181xf32> to vector<8x151xf32>
    %c32 = arith.constant 32 : index
    %c0_76 = arith.constant 0 : index
    %98 = vector.load %arg14[%c32, %c0_76] : memref<72x256xf32, #tpu.memory_space<vmem>>, vector<8x151xf32>
    tpu.vector_store %arg14[%c32, %c0_76], %97 {strides = array<i32>} : memref<72x256xf32, #tpu.memory_space<vmem>>, vector<8x151xf32>,
    %99 = vector.extract_strided_slice %88 {offsets = [0, 16], sizes = [8, 151], strides = [1, 1]} : vector<8x181xf32> to vector<8x151xf32>
    %c40 = arith.constant 40 : index
    %c0_77 = arith.constant 0 : index
    %100 = vector.load %arg14[%c40, %c0_77] : memref<72x256xf32, #tpu.memory_space<vmem>>, vector<8x151xf32>
    tpu.vector_store %arg14[%c40, %c0_77], %99 {strides = array<i32>} : memref<72x256xf32, #tpu.memory_space<vmem>>, vector<8x151xf32>,
    %101 = vector.extract_strided_slice %88 {offsets = [0, 28], sizes = [8, 151], strides = [1, 1]} : vector<8x181xf32> to vector<8x151xf32>
    %c48 = arith.constant 48 : index
    %c0_78 = arith.constant 0 : index
    %102 = vector.load %arg14[%c48, %c0_78] : memref<72x256xf32, #tpu.memory_space<vmem>>, vector<8x151xf32>
    tpu.vector_store %arg14[%c48, %c0_78], %101 {strides = array<i32>} : memref<72x256xf32, #tpu.memory_space<vmem>>, vector<8x151xf32>,
    %103 = vector.extract_strided_slice %88 {offsets = [0, 29], sizes = [8, 151], strides = [1, 1]} : vector<8x181xf32> to vector<8x151xf32>
    %c56 = arith.constant 56 : index
    %c0_79 = arith.constant 0 : index
    %104 = vector.load %arg14[%c56, %c0_79] : memref<72x256xf32, #tpu.memory_space<vmem>>, vector<8x151xf32>
    tpu.vector_store %arg14[%c56, %c0_79], %103 {strides = array<i32>} : memref<72x256xf32, #tpu.memory_space<vmem>>, vector<8x151xf32>,
    %105 = vector.extract_strided_slice %88 {offsets = [0, 30], sizes = [8, 151], strides = [1, 1]} : vector<8x181xf32> to vector<8x151xf32>
    %c64 = arith.constant 64 : index
    %c0_80 = arith.constant 0 : index
    %106 = vector.load %arg14[%c64, %c0_80] : memref<72x256xf32, #tpu.memory_space<vmem>>, vector<8x151xf32>
    tpu.vector_store %arg14[%c64, %c0_80], %105 {strides = array<i32>} : memref<72x256xf32, #tpu.memory_space<vmem>>, vector<8x151xf32>,
    %c0_81 = arith.constant 0 : index
    %c0_82 = arith.constant 0 : index
    %107 = vector.load %arg4[%c0_81, %c0_82] : memref<16x72xf32, #tpu.memory_space<vmem>>, vector<16x72xf32>
    %c0_83 = arith.constant 0 : index
    %c0_84 = arith.constant 0 : index
    %108 = vector.load %arg14[%c0_83, %c0_84] : memref<72x256xf32, #tpu.memory_space<vmem>>, vector<72x256xf32>
    %cst_85 = arith.constant dense<0.000000e+00> : vector<16x256xf32>
    %109 = tpu.matmul %107, %108, %cst_85 {dimension_numbers = #tpu.dot_dimension_numbers<[1], [0], [0], [1], [0, 0, 1, 1], [], []>} : vector<16x72xf32>, vector<72x256xf32>, vector<16x256xf32> -> vector<16x256xf32>
    %c0_86 = arith.constant 0 : index
    %c0_87 = arith.constant 0 : index
    %110 = vector.load %arg5[%c0_86, %c0_87] : memref<16x1xf32, #tpu.memory_space<vmem>>, vector<16x1xf32>
    %111 = vector.broadcast %110 : vector<16x1xf32> to vector<16x256xf32>
    %112 = arith.addf %109, %111 : vector<16x256xf32>
    %cst_88 = arith.constant 0.000000e+00 : f32
    %113 = vector.broadcast %cst_88 : f32 to vector<16x256xf32>
    %114 = arith.maximumf %112, %113 : vector<16x256xf32>
    %115 = vector.extract_strided_slice %114 {offsets = [0, 0], sizes = [16, 121], strides = [1, 1]} : vector<16x256xf32> to vector<16x121xf32>
    %116 = vector.extract_strided_slice %114 {offsets = [0, 1], sizes = [16, 121], strides = [1, 1]} : vector<16x256xf32> to vector<16x121xf32>
    %117 = arith.maximumf %115, %116 : vector<16x121xf32>
    %118 = vector.extract_strided_slice %114 {offsets = [0, 14], sizes = [16, 121], strides = [1, 1]} : vector<16x256xf32> to vector<16x121xf32>
    %119 = vector.extract_strided_slice %114 {offsets = [0, 15], sizes = [16, 121], strides = [1, 1]} : vector<16x256xf32> to vector<16x121xf32>
    %120 = arith.maximumf %118, %119 : vector<16x121xf32>
    %121 = arith.maximumf %117, %120 : vector<16x121xf32>
    %122 = tpu.iota {dimensions = array<i32: 0>} : vector<121x25xi32>
    %123 = tpu.iota {dimensions = array<i32: 1>} : vector<121x25xi32>
    %c5_i32 = arith.constant 5 : i32
    %124 = vector.broadcast %c5_i32 : i32 to vector<121x25xi32>
    %125 = arith.cmpi sge, %123, %124 : vector<121x25xi32>
    %126 = arith.extui %125 : vector<121x25xi1> to vector<121x25xi32>
    %c10_i32 = arith.constant 10 : i32
    %127 = vector.broadcast %c10_i32 : i32 to vector<121x25xi32>
    %128 = arith.cmpi sge, %123, %127 : vector<121x25xi32>
    %129 = arith.extui %128 : vector<121x25xi1> to vector<121x25xi32>
    %130 = arith.addi %126, %129 : vector<121x25xi32>
    %c15_i32 = arith.constant 15 : i32
    %131 = vector.broadcast %c15_i32 : i32 to vector<121x25xi32>
    %132 = arith.cmpi sge, %123, %131 : vector<121x25xi32>
    %133 = arith.extui %132 : vector<121x25xi1> to vector<121x25xi32>
    %134 = arith.addi %130, %133 : vector<121x25xi32>
    %c20_i32 = arith.constant 20 : i32
    %135 = vector.broadcast %c20_i32 : i32 to vector<121x25xi32>
    %136 = arith.cmpi sge, %123, %135 : vector<121x25xi32>
    %137 = arith.extui %136 : vector<121x25xi1> to vector<121x25xi32>
    %138 = arith.addi %134, %137 : vector<121x25xi32>
    %c5_i32_89 = arith.constant 5 : i32
    %139 = vector.broadcast %c5_i32_89 : i32 to vector<121x25xi32>
    %140 = arith.muli %139, %138 : vector<121x25xi32>
    %141 = arith.subi %123, %140 : vector<121x25xi32>
    %c28_i32 = arith.constant 28 : i32
    %142 = vector.broadcast %c28_i32 : i32 to vector<121x25xi32>
    %143 = arith.muli %142, %138 : vector<121x25xi32>
    %c2_i32 = arith.constant 2 : i32
    %144 = vector.broadcast %c2_i32 : i32 to vector<121x25xi32>
    %145 = arith.muli %144, %141 : vector<121x25xi32>
    %146 = arith.addi %143, %145 : vector<121x25xi32>
    %147 = arith.cmpi eq, %122, %146 : vector<121x25xi32>
    %148 = arith.extui %147 : vector<121x25xi1> to vector<121x25xi32>
    %149 = arith.sitofp %148 : vector<121x25xi32> to vector<121x25xf32>
    %cst_90 = arith.constant dense<0.000000e+00> : vector<16x25xf32>
    %150 = tpu.matmul %121, %149, %cst_90 {dimension_numbers = #tpu.dot_dimension_numbers<[1], [0], [0], [1], [0, 0, 1, 1], [], []>} : vector<16x121xf32>, vector<121x25xf32>, vector<16x25xf32> -> vector<16x25xf32>
    %c0_91 = arith.constant 0 : index
    %c0_92 = arith.constant 0 : index
    %151 = vector.load %arg15[%c0_91, %c0_92] : memref<16x128xf32, #tpu.memory_space<vmem>>, vector<16x25xf32>
    tpu.vector_store %arg15[%c0_91, %c0_92], %150 {strides = array<i32>} : memref<16x128xf32, #tpu.memory_space<vmem>>, vector<16x25xf32>,
    %c0_93 = arith.constant 0 : index
    %c0_94 = arith.constant 0 : index
    %152 = vector.load %arg15[%c0_93, %c0_94] : memref<16x128xf32, #tpu.memory_space<vmem>>, vector<1x25xf32>
    %c0_95 = arith.constant 0 : index
    %c0_96 = arith.constant 0 : index
    %153 = vector.load %arg16[%c0_95, %c0_96] : memref<8x512xf32, #tpu.memory_space<vmem>>, vector<1x25xf32>
    tpu.vector_store %arg16[%c0_95, %c0_96], %152 {strides = array<i32>} : memref<8x512xf32, #tpu.memory_space<vmem>>, vector<1x25xf32>,
    %c1_97 = arith.constant 1 : index
    %c0_98 = arith.constant 0 : index
    %154 = vector.load %arg15[%c1_97, %c0_98] : memref<16x128xf32, #tpu.memory_space<vmem>>, vector<1x25xf32>
    %c0_99 = arith.constant 0 : index
    %c25 = arith.constant 25 : index
    %155 = vector.load %arg16[%c0_99, %c25] : memref<8x512xf32, #tpu.memory_space<vmem>>, vector<1x25xf32>
    tpu.vector_store %arg16[%c0_99, %c25], %154 {strides = array<i32>} : memref<8x512xf32, #tpu.memory_space<vmem>>, vector<1x25xf32>,
    %c2_100 = arith.constant 2 : index
    %c0_101 = arith.constant 0 : index
    %156 = vector.load %arg15[%c2_100, %c0_101] : memref<16x128xf32, #tpu.memory_space<vmem>>, vector<1x25xf32>
    %c0_102 = arith.constant 0 : index
    %c50 = arith.constant 50 : index
    %157 = vector.load %arg16[%c0_102, %c50] : memref<8x512xf32, #tpu.memory_space<vmem>>, vector<1x25xf32>
    tpu.vector_store %arg16[%c0_102, %c50], %156 {strides = array<i32>} : memref<8x512xf32, #tpu.memory_space<vmem>>, vector<1x25xf32>,
    %c3_103 = arith.constant 3 : index
    %c0_104 = arith.constant 0 : index
    %158 = vector.load %arg15[%c3_103, %c0_104] : memref<16x128xf32, #tpu.memory_space<vmem>>, vector<1x25xf32>
    %c0_105 = arith.constant 0 : index
    %c75 = arith.constant 75 : index
    %159 = vector.load %arg16[%c0_105, %c75] : memref<8x512xf32, #tpu.memory_space<vmem>>, vector<1x25xf32>
    tpu.vector_store %arg16[%c0_105, %c75], %158 {strides = array<i32>} : memref<8x512xf32, #tpu.memory_space<vmem>>, vector<1x25xf32>,
    %c4_106 = arith.constant 4 : index
    %c0_107 = arith.constant 0 : index
    %160 = vector.load %arg15[%c4_106, %c0_107] : memref<16x128xf32, #tpu.memory_space<vmem>>, vector<1x25xf32>
    %c0_108 = arith.constant 0 : index
    %c100 = arith.constant 100 : index
    %161 = vector.load %arg16[%c0_108, %c100] : memref<8x512xf32, #tpu.memory_space<vmem>>, vector<1x25xf32>
    tpu.vector_store %arg16[%c0_108, %c100], %160 {strides = array<i32>} : memref<8x512xf32, #tpu.memory_space<vmem>>, vector<1x25xf32>,
    %c5_109 = arith.constant 5 : index
    %c0_110 = arith.constant 0 : index
    %162 = vector.load %arg15[%c5_109, %c0_110] : memref<16x128xf32, #tpu.memory_space<vmem>>, vector<1x25xf32>
    %c0_111 = arith.constant 0 : index
    %c125 = arith.constant 125 : index
    %163 = vector.load %arg16[%c0_111, %c125] : memref<8x512xf32, #tpu.memory_space<vmem>>, vector<1x25xf32>
    tpu.vector_store %arg16[%c0_111, %c125], %162 {strides = array<i32>} : memref<8x512xf32, #tpu.memory_space<vmem>>, vector<1x25xf32>,
    %c6_112 = arith.constant 6 : index
    %c0_113 = arith.constant 0 : index
    %164 = vector.load %arg15[%c6_112, %c0_113] : memref<16x128xf32, #tpu.memory_space<vmem>>, vector<1x25xf32>
    %c0_114 = arith.constant 0 : index
    %c150 = arith.constant 150 : index
    %165 = vector.load %arg16[%c0_114, %c150] : memref<8x512xf32, #tpu.memory_space<vmem>>, vector<1x25xf32>
    tpu.vector_store %arg16[%c0_114, %c150], %164 {strides = array<i32>} : memref<8x512xf32, #tpu.memory_space<vmem>>, vector<1x25xf32>,
    %c7_115 = arith.constant 7 : index
    %c0_116 = arith.constant 0 : index
    %166 = vector.load %arg15[%c7_115, %c0_116] : memref<16x128xf32, #tpu.memory_space<vmem>>, vector<1x25xf32>
    %c0_117 = arith.constant 0 : index
    %c175 = arith.constant 175 : index
    %167 = vector.load %arg16[%c0_117, %c175] : memref<8x512xf32, #tpu.memory_space<vmem>>, vector<1x25xf32>
    tpu.vector_store %arg16[%c0_117, %c175], %166 {strides = array<i32>} : memref<8x512xf32, #tpu.memory_space<vmem>>, vector<1x25xf32>,
    %c8_118 = arith.constant 8 : index
    %c0_119 = arith.constant 0 : index
    %168 = vector.load %arg15[%c8_118, %c0_119] : memref<16x128xf32, #tpu.memory_space<vmem>>, vector<1x25xf32>
    %c0_120 = arith.constant 0 : index
    %c200 = arith.constant 200 : index
    %169 = vector.load %arg16[%c0_120, %c200] : memref<8x512xf32, #tpu.memory_space<vmem>>, vector<1x25xf32>
    tpu.vector_store %arg16[%c0_120, %c200], %168 {strides = array<i32>} : memref<8x512xf32, #tpu.memory_space<vmem>>, vector<1x25xf32>,
    %c9 = arith.constant 9 : index
    %c0_121 = arith.constant 0 : index
    %170 = vector.load %arg15[%c9, %c0_121] : memref<16x128xf32, #tpu.memory_space<vmem>>, vector<1x25xf32>
    %c0_122 = arith.constant 0 : index
    %c225 = arith.constant 225 : index
    %171 = vector.load %arg16[%c0_122, %c225] : memref<8x512xf32, #tpu.memory_space<vmem>>, vector<1x25xf32>
    tpu.vector_store %arg16[%c0_122, %c225], %170 {strides = array<i32>} : memref<8x512xf32, #tpu.memory_space<vmem>>, vector<1x25xf32>,
    %c10 = arith.constant 10 : index
    %c0_123 = arith.constant 0 : index
    %172 = vector.load %arg15[%c10, %c0_123] : memref<16x128xf32, #tpu.memory_space<vmem>>, vector<1x25xf32>
    %c0_124 = arith.constant 0 : index
    %c250 = arith.constant 250 : index
    %173 = vector.load %arg16[%c0_124, %c250] : memref<8x512xf32, #tpu.memory_space<vmem>>, vector<1x25xf32>
    tpu.vector_store %arg16[%c0_124, %c250], %172 {strides = array<i32>} : memref<8x512xf32, #tpu.memory_space<vmem>>, vector<1x25xf32>,
    %c11 = arith.constant 11 : index
    %c0_125 = arith.constant 0 : index
    %174 = vector.load %arg15[%c11, %c0_125] : memref<16x128xf32, #tpu.memory_space<vmem>>, vector<1x25xf32>
    %c0_126 = arith.constant 0 : index
    %c275 = arith.constant 275 : index
    %175 = vector.load %arg16[%c0_126, %c275] : memref<8x512xf32, #tpu.memory_space<vmem>>, vector<1x25xf32>
    tpu.vector_store %arg16[%c0_126, %c275], %174 {strides = array<i32>} : memref<8x512xf32, #tpu.memory_space<vmem>>, vector<1x25xf32>,
    %c12 = arith.constant 12 : index
    %c0_127 = arith.constant 0 : index
    %176 = vector.load %arg15[%c12, %c0_127] : memref<16x128xf32, #tpu.memory_space<vmem>>, vector<1x25xf32>
    %c0_128 = arith.constant 0 : index
    %c300 = arith.constant 300 : index
    %177 = vector.load %arg16[%c0_128, %c300] : memref<8x512xf32, #tpu.memory_space<vmem>>, vector<1x25xf32>
    tpu.vector_store %arg16[%c0_128, %c300], %176 {strides = array<i32>} : memref<8x512xf32, #tpu.memory_space<vmem>>, vector<1x25xf32>,
    %c13 = arith.constant 13 : index
    %c0_129 = arith.constant 0 : index
    %178 = vector.load %arg15[%c13, %c0_129] : memref<16x128xf32, #tpu.memory_space<vmem>>, vector<1x25xf32>
    %c0_130 = arith.constant 0 : index
    %c325 = arith.constant 325 : index
    %179 = vector.load %arg16[%c0_130, %c325] : memref<8x512xf32, #tpu.memory_space<vmem>>, vector<1x25xf32>
    tpu.vector_store %arg16[%c0_130, %c325], %178 {strides = array<i32>} : memref<8x512xf32, #tpu.memory_space<vmem>>, vector<1x25xf32>,
    %c14 = arith.constant 14 : index
    %c0_131 = arith.constant 0 : index
    %180 = vector.load %arg15[%c14, %c0_131] : memref<16x128xf32, #tpu.memory_space<vmem>>, vector<1x25xf32>
    %c0_132 = arith.constant 0 : index
    %c350 = arith.constant 350 : index
    %181 = vector.load %arg16[%c0_132, %c350] : memref<8x512xf32, #tpu.memory_space<vmem>>, vector<1x25xf32>
    tpu.vector_store %arg16[%c0_132, %c350], %180 {strides = array<i32>} : memref<8x512xf32, #tpu.memory_space<vmem>>, vector<1x25xf32>,
    %c15 = arith.constant 15 : index
    %c0_133 = arith.constant 0 : index
    %182 = vector.load %arg15[%c15, %c0_133] : memref<16x128xf32, #tpu.memory_space<vmem>>, vector<1x25xf32>
    %c0_134 = arith.constant 0 : index
    %c375 = arith.constant 375 : index
    %183 = vector.load %arg16[%c0_134, %c375] : memref<8x512xf32, #tpu.memory_space<vmem>>, vector<1x25xf32>
    tpu.vector_store %arg16[%c0_134, %c375], %182 {strides = array<i32>} : memref<8x512xf32, #tpu.memory_space<vmem>>, vector<1x25xf32>,
    %c0_135 = arith.constant 0 : index
    %c0_136 = arith.constant 0 : index
    %184 = vector.load %arg16[%c0_135, %c0_136] : memref<8x512xf32, #tpu.memory_space<vmem>>, vector<1x400xf32>
    %c0_137 = arith.constant 0 : index
    %c0_138 = arith.constant 0 : index
    %185 = vector.load %arg6[%c0_137, %c0_138] : memref<400x120xbf16, #tpu.memory_space<vmem>>, vector<400x120xbf16>
    %186 = arith.extf %185 : vector<400x120xbf16> to vector<400x120xf32>
    %cst_139 = arith.constant dense<0.000000e+00> : vector<1x120xf32>
    %187 = tpu.matmul %184, %186, %cst_139 {dimension_numbers = #tpu.dot_dimension_numbers<[1], [0], [0], [1], [0, 0, 1, 1], [], []>} : vector<1x400xf32>, vector<400x120xf32>, vector<1x120xf32> -> vector<1x120xf32>
    %c0_140 = arith.constant 0 : index
    %c0_141 = arith.constant 0 : index
    %188 = vector.load %arg7[%c0_140, %c0_141] : memref<1x120xf32, #tpu.memory_space<vmem>>, vector<1x120xf32>
    %189 = arith.addf %187, %188 : vector<1x120xf32>
    %cst_142 = arith.constant 0.000000e+00 : f32
    %190 = vector.broadcast %cst_142 : f32 to vector<1x120xf32>
    %191 = arith.maximumf %189, %190 : vector<1x120xf32>
    %c0_143 = arith.constant 0 : index
    %c0_144 = arith.constant 0 : index
    %192 = vector.load %arg8[%c0_143, %c0_144] : memref<120x84xbf16, #tpu.memory_space<vmem>>, vector<120x84xbf16>
    %193 = arith.extf %192 : vector<120x84xbf16> to vector<120x84xf32>
    %cst_145 = arith.constant dense<0.000000e+00> : vector<1x84xf32>
    %194 = tpu.matmul %191, %193, %cst_145 {dimension_numbers = #tpu.dot_dimension_numbers<[1], [0], [0], [1], [0, 0, 1, 1], [], []>} : vector<1x120xf32>, vector<120x84xf32>, vector<1x84xf32> -> vector<1x84xf32>
    %c0_146 = arith.constant 0 : index
    %c0_147 = arith.constant 0 : index
    %195 = vector.load %arg9[%c0_146, %c0_147] : memref<1x84xf32, #tpu.memory_space<vmem>>, vector<1x84xf32>
    %196 = arith.addf %194, %195 : vector<1x84xf32>
    %cst_148 = arith.constant 0.000000e+00 : f32
    %197 = vector.broadcast %cst_148 : f32 to vector<1x84xf32>
    %198 = arith.maximumf %196, %197 : vector<1x84xf32>
    %c0_149 = arith.constant 0 : index
    %c0_150 = arith.constant 0 : index
    %199 = vector.load %arg10[%c0_149, %c0_150] : memref<84x10xbf16, #tpu.memory_space<vmem>>, vector<84x10xbf16>
    %200 = arith.extf %199 : vector<84x10xbf16> to vector<84x10xf32>
    %cst_151 = arith.constant dense<0.000000e+00> : vector<1x10xf32>
    %201 = tpu.matmul %198, %200, %cst_151 {dimension_numbers = #tpu.dot_dimension_numbers<[1], [0], [0], [1], [0, 0, 1, 1], [], []>} : vector<1x84xf32>, vector<84x10xf32>, vector<1x10xf32> -> vector<1x10xf32>
    %c0_152 = arith.constant 0 : index
    %c0_153 = arith.constant 0 : index
    %202 = vector.load %arg11[%c0_152, %c0_153] : memref<1x10xf32, #tpu.memory_space<vmem>>, vector<1x10xf32>
    %203 = arith.addf %201, %202 : vector<1x10xf32>
    %c0_154 = arith.constant 0 : index
    %c0_155 = arith.constant 0 : index
    %c0_156 = arith.constant 0 : index
    %204 = vector.load %arg12[%c0_154, %c0_155, %c0_156] : memref<1x1x10xf32, #tpu.memory_space<vmem>>, vector<1x1x10xf32>
    %205 = vector.shape_cast %204 : vector<1x1x10xf32> to vector<1x10xf32>
    %206 = vector.shape_cast %203 : vector<1x10xf32> to vector<1x1x10xf32>
    tpu.vector_store %arg12[%c0_154, %c0_155, %c0_156], %206 {strides = array<i32>} : memref<1x1x10xf32, #tpu.memory_space<vmem>>, vector<1x1x10xf32>,
    return
  }
  func.func @transform_0(%arg0: i32) -> (i32, i32, i32) {
    %c0_i32 = arith.constant 0 : i32
    %c0_i32_0 = arith.constant 0 : i32
    %c0_i32_1 = arith.constant 0 : i32
    return %arg0, %c0_i32, %c0_i32_0 : i32, i32, i32
  }
  func.func @transform_1(%arg0: i32) -> (i32, i32) {
    %c0_i32 = arith.constant 0 : i32
    %c0_i32_0 = arith.constant 0 : i32
    %c0_i32_1 = arith.constant 0 : i32
    return %c0_i32, %c0_i32_0 : i32, i32
  }
  func.func @transform_2(%arg0: i32) -> (i32, i32) {
    %c0_i32 = arith.constant 0 : i32
    %c0_i32_0 = arith.constant 0 : i32
    %c0_i32_1 = arith.constant 0 : i32
    return %c0_i32, %c0_i32_0 : i32, i32
  }
  func.func @transform_3(%arg0: i32) -> (i32, i32) {
    %c0_i32 = arith.constant 0 : i32
    %c0_i32_0 = arith.constant 0 : i32
    %c0_i32_1 = arith.constant 0 : i32
    return %c0_i32, %c0_i32_0 : i32, i32
  }
  func.func @transform_4(%arg0: i32) -> (i32, i32) {
    %c0_i32 = arith.constant 0 : i32
    %c0_i32_0 = arith.constant 0 : i32
    %c0_i32_1 = arith.constant 0 : i32
    return %c0_i32, %c0_i32_0 : i32, i32
  }
  func.func @transform_5(%arg0: i32) -> (i32, i32) {
    %c0_i32 = arith.constant 0 : i32
    %c0_i32_0 = arith.constant 0 : i32
    %c0_i32_1 = arith.constant 0 : i32
    return %c0_i32, %c0_i32_0 : i32, i32
  }
  func.func @transform_6(%arg0: i32) -> (i32, i32) {
    %c0_i32 = arith.constant 0 : i32
    %c0_i32_0 = arith.constant 0 : i32
    %c0_i32_1 = arith.constant 0 : i32
    return %c0_i32, %c0_i32_0 : i32, i32
  }
  func.func @transform_7(%arg0: i32) -> (i32, i32) {
    %c0_i32 = arith.constant 0 : i32
    %c0_i32_0 = arith.constant 0 : i32
    %c0_i32_1 = arith.constant 0 : i32
    return %c0_i32, %c0_i32_0 : i32, i32
  }
  func.func @transform_8(%arg0: i32) -> (i32, i32) {
    %c0_i32 = arith.constant 0 : i32
    %c0_i32_0 = arith.constant 0 : i32
    %c0_i32_1 = arith.constant 0 : i32
    return %c0_i32, %c0_i32_0 : i32, i32
  }
  func.func @transform_9(%arg0: i32) -> (i32, i32) {
    %c0_i32 = arith.constant 0 : i32
    %c0_i32_0 = arith.constant 0 : i32
    %c0_i32_1 = arith.constant 0 : i32
    return %c0_i32, %c0_i32_0 : i32, i32
  }
  func.func @transform_10(%arg0: i32) -> (i32, i32) {
    %c0_i32 = arith.constant 0 : i32
    %c0_i32_0 = arith.constant 0 : i32
    %c0_i32_1 = arith.constant 0 : i32
    return %c0_i32, %c0_i32_0 : i32, i32
  }
  func.func @transform_11(%arg0: i32) -> (i32, i32, i32) {
    %c0_i32 = arith.constant 0 : i32
    %c0_i32_0 = arith.constant 0 : i32
    %c0_i32_1 = arith.constant 0 : i32
    return %arg0, %c0_i32, %c0_i32_0 : i32, i32, i32
  }
}

</mosaic_0001>

<llo_original>
// kernel: lenet_forward.1
$region0: #{lenet_forward.1}
  #allocation0 [shape = 'u32[]', space=smem, size = 0x4, offset = 0x4, fixed_abs, tag = 'smem constant byte address 0x4 - core index']
  #allocation1 [shape = 'u32[72,128]{1,0:T(1,128)}', space=vmem, size = 0x9000, scoped, tag = 'internal scratch']
  #allocation2 [shape = 'f32[16,1024]{1,0:T(8,128)}', space=vmem, size = 0x10000, scoped, tag = 'scratch operand']
  #allocation3 [shape = 'f32[72,256]{1,0:T(8,128)}', space=vmem, size = 0x12000, scoped, tag = 'scratch operand']
  #allocation4 [shape = 'f32[16,128]{1,0:T(8,128)}', space=vmem, size = 0x2000, scoped, tag = 'scratch operand']
  #allocation5 [shape = 'f32[8,512]{1,0:T(8,128)}', space=vmem, size = 0x4000, scoped, tag = 'scratch operand']
  %s0 = inlined_call_operand.vmem [shape: f32[2,4,196], index: 0, kind: input, shape index: {}]
  %s1 = inlined_call_operand.vmem [shape: f32[8,9], index: 1, kind: input, shape index: {}]
  %s2 = inlined_call_operand.vmem [shape: f32[8,1], index: 2, kind: input, shape index: {}]
  %s3 = inlined_call_operand.vmem [shape: f32[16,72], index: 3, kind: input, shape index: {}]
  %s4 = inlined_call_operand.vmem [shape: f32[16,1], index: 4, kind: input, shape index: {}]
  %s5 = inlined_call_operand.vmem [shape: bf16[400,120], index: 5, kind: input, shape index: {}]
  %s6 = inlined_call_operand.vmem [shape: f32[1,120], index: 6, kind: input, shape index: {}]
  %s7 = inlined_call_operand.vmem [shape: bf16[120,84], index: 7, kind: input, shape index: {}]
  %s8 = inlined_call_operand.vmem [shape: f32[1,84], index: 8, kind: input, shape index: {}]
  %s9 = inlined_call_operand.vmem [shape: bf16[84,10], index: 9, kind: input, shape index: {}]
  %s10 = inlined_call_operand.vmem [shape: f32[1,10], index: 10, kind: input, shape index: {}]
  %s11 = inlined_call_operand.hbm [shape: f32[2,1,10], index: 11, kind: output, shape index: {}]
  %s12 = sld [smem:[#allocation0]]
  $region77: #{lenet_forward.1} parent=0
    _
  %s14 = ssub.s32 1, %s12
  %s15 = scalar_select 0, %s14, %s12
  $region1: #{lenet_forward.1} parent=0
    #allocation6 [shape = 'u8[1024]{0}', space=vmem, size = 0x400, scoped, tag = 'output window, operand 0']
    #allocation7 [shape = 's32[2]{0}', space=sflag, size = 0x8, scoped, tag = 'scoped memory for lenet_forward.1']
    %16 = vsyncpa [#allocation7], 0
    %s17 = scalar_lea.sflag [#allocation7], 1
    %18 = vsyncpa %s17, 0
    loop: start=0, step=1, limit=4
    $region2: #{lenet_forward.1} parent=1 // loop_pre_header
      _
    $region3: #{lenet_forward.1} parent=1 // loop_header
      %s20 = sphi 0, %s24
      %p21 = scmp.ge.s32.totalorder %s20, 4
      %s30 = sphi 0, %s32
      %s33 = sphi 0, %s30
      %s34 = sphi 0, %s33
      %s50 = sphi 0, %s34
      %s54 = sphi 0, %s54
      %s56 = sphi 0, %s54
      %s57 = sphi 0, %s56
      %s71 = sphi 0, %s57
      %s75 = sphi 0, %s75
      %s77 = sphi 0, %s75
      %s78 = sphi 0, %s77
      %s92 = sphi 0, %s78
      %s96 = sphi 0, %s96
      %s98 = sphi 0, %s96
      %s99 = sphi 0, %s98
      %s113 = sphi 0, %s99
      %s117 = sphi 0, %s117
      %s119 = sphi 0, %s117
      %s120 = sphi 0, %s119
      %s134 = sphi 0, %s120
      %s138 = sphi 0, %s138
      %s140 = sphi 0, %s138
      %s141 = sphi 0, %s140
      %s155 = sphi 0, %s141
      %s159 = sphi 0, %s159
      %s161 = sphi 0, %s159
      %s162 = sphi 0, %s161
      %s176 = sphi 0, %s162
      %s180 = sphi 0, %s180
      %s182 = sphi 0, %s180
      %s183 = sphi 0, %s182
      %s197 = sphi 0, %s183
      %s201 = sphi 0, %s201
      %s203 = sphi 0, %s201
      %s204 = sphi 0, %s203
      %s218 = sphi 0, %s204
      %s222 = sphi 0, %s222
      %s224 = sphi 0, %s222
      %s225 = sphi 0, %s224
      %s239 = sphi 0, %s225
      %s243 = sphi 0, %s243
      %s245 = sphi 0, %s243
      %s246 = sphi 0, %s245
      %s260 = sphi 0, %s246
      %s266 = sphi 0, %s268
      %s269 = sphi 0, %s266
      %s270 = sphi 0, %s269
      %s286 = sphi 0, %s270
    $region4: #{lenet_forward.1} parent=1 // loop_header_branch
      %23 = sbr.rel (%p21) target = $region8
    $region5: #{lenet_forward.1} parent=1 // loop_body
      %s25 = ssub.s32 %s20, 1
      %s26 = ssub.s32 %s20, 2
      %s27 = sadd.s32 %s20, 1
      %s28 = ssub.s32 %s20, %s27
      %p29 = scmp.eq.s32.totalorder %s28, 0
      %s31 = sadd.s32 %s30, 1
      %s32 = scalar_select %p29, %s30, %s31
      %p35 = pneg %p29
      %p36 = scmp.eq.s32.totalorder %s20, 1
      %p37 = por %p35, %p36
      %p38 = scmp.ne.s32.totalorder %s30, %s33
      %p39 = scmp.eq.s32.totalorder %s20, 0
      %p40 = por %p38, %p39
      %p41 = scmp.ne.s32.totalorder %s30, %s33
      %p42 = scmp.eq.s32.totalorder %s25, 1
      %p43 = por %p41, %p42
      %p44 = scmp.ne.s32.totalorder %s33, %s34
      %p45 = scmp.eq.s32.totalorder %s25, 0
      %p46 = por %p44, %p45
      %p47 = scmp.ne.s32.totalorder %s33, %s34
      %p48 = scmp.eq.s32.totalorder %s26, 1
      %p49 = por %p47, %p48
      %p51 = scmp.ne.s32.totalorder %s34, %s50
      %p52 = scmp.eq.s32.totalorder %s26, 0
      %p53 = por %p51, %p52
      %s55 = sadd.s32 %s54, 1
      %p58 = scmp.eq.s32.totalorder %s20, 1
      %p59 = scmp.ne.s32.totalorder %s54, %s56
      %p60 = scmp.eq.s32.totalorder %s20, 0
      %p61 = por %p59, %p60
      %p62 = scmp.ne.s32.totalorder %s54, %s56
      %p63 = scmp.eq.s32.totalorder %s25, 1
      %p64 = por %p62, %p63
      %p65 = scmp.ne.s32.totalorder %s56, %s57
      %p66 = scmp.eq.s32.totalorder %s25, 0
      %p67 = por %p65, %p66
      %p68 = scmp.ne.s32.totalorder %s56, %s57
      %p69 = scmp.eq.s32.totalorder %s26, 1
      %p70 = por %p68, %p69
      %p72 = scmp.ne.s32.totalorder %s57, %s71
      %p73 = scmp.eq.s32.totalorder %s26, 0
      %p74 = por %p72, %p73
      %s76 = sadd.s32 %s75, 1
      %p79 = scmp.eq.s32.totalorder %s20, 1
      %p80 = scmp.ne.s32.totalorder %s75, %s77
      %p81 = scmp.eq.s32.totalorder %s20, 0
      %p82 = por %p80, %p81
      %p83 = scmp.ne.s32.totalorder %s75, %s77
      %p84 = scmp.eq.s32.totalorder %s25, 1
      %p85 = por %p83, %p84
      %p86 = scmp.ne.s32.totalorder %s77, %s78
      %p87 = scmp.eq.s32.totalorder %s25, 0
      %p88 = por %p86, %p87
      %p89 = scmp.ne.s32.totalorder %s77, %s78
      %p90 = scmp.eq.s32.totalorder %s26, 1
      %p91 = por %p89, %p90
      %p93 = scmp.ne.s32.totalorder %s78, %s92
      %p94 = scmp.eq.s32.totalorder %s26, 0
      %p95 = por %p93, %p94
      %s97 = sadd.s32 %s96, 1
      %p100 = scmp.eq.s32.totalorder %s20, 1
      %p101 = scmp.ne.s32.totalorder %s96, %s98
      %p102 = scmp.eq.s32.totalorder %s20, 0
      %p103 = por %p101, %p102
      %p104 = scmp.ne.s32.totalorder %s96, %s98
      %p105 = scmp.eq.s32.totalorder %s25, 1
      %p106 = por %p104, %p105
      %p107 = scmp.ne.s32.totalorder %s98, %s99
      %p108 = scmp.eq.s32.totalorder %s25, 0
      %p109 = por %p107, %p108
      %p110 = scmp.ne.s32.totalorder %s98, %s99
      %p111 = scmp.eq.s32.totalorder %s26, 1
      %p112 = por %p110, %p111
      %p114 = scmp.ne.s32.totalorder %s99, %s113
      %p115 = scmp.eq.s32.totalorder %s26, 0
      %p116 = por %p114, %p115
      %s118 = sadd.s32 %s117, 1
      %p121 = scmp.eq.s32.totalorder %s20, 1
      %p122 = scmp.ne.s32.totalorder %s117, %s119
      %p123 = scmp.eq.s32.totalorder %s20, 0
      %p124 = por %p122, %p123
      %p125 = scmp.ne.s32.totalorder %s117, %s119
      %p126 = scmp.eq.s32.totalorder %s25, 1
      %p127 = por %p125, %p126
      %p128 = scmp.ne.s32.totalorder %s119, %s120
      %p129 = scmp.eq.s32.totalorder %s25, 0
      %p130 = por %p128, %p129
      %p131 = scmp.ne.s32.totalorder %s119, %s120
      %p132 = scmp.eq.s32.totalorder %s26, 1
      %p133 = por %p131, %p132
      %p135 = scmp.ne.s32.totalorder %s120, %s134
      %p136 = scmp.eq.s32.totalorder %s26, 0
      %p137 = por %p135, %p136
      %s139 = sadd.s32 %s138, 1
      %p142 = scmp.eq.s32.totalorder %s20, 1
      %p143 = scmp.ne.s32.totalorder %s138, %s140
      %p144 = scmp.eq.s32.totalorder %s20, 0
      %p145 = por %p143, %p144
      %p146 = scmp.ne.s32.totalorder %s138, %s140
      %p147 = scmp.eq.s32.totalorder %s25, 1
      %p148 = por %p146, %p147
      %p149 = scmp.ne.s32.totalorder %s140, %s141
      %p150 = scmp.eq.s32.totalorder %s25, 0
      %p151 = por %p149, %p150
      %p152 = scmp.ne.s32.totalorder %s140, %s141
      %p153 = scmp.eq.s32.totalorder %s26, 1
      %p154 = por %p152, %p153
      %p156 = scmp.ne.s32.totalorder %s141, %s155
      %p157 = scmp.eq.s32.totalorder %s26, 0
      %p158 = por %p156, %p157
      %s160 = sadd.s32 %s159, 1
      %p163 = scmp.eq.s32.totalorder %s20, 1
      %p164 = scmp.ne.s32.totalorder %s159, %s161
      %p165 = scmp.eq.s32.totalorder %s20, 0
      %p166 = por %p164, %p165
      %p167 = scmp.ne.s32.totalorder %s159, %s161
      %p168 = scmp.eq.s32.totalorder %s25, 1
      %p169 = por %p167, %p168
      %p170 = scmp.ne.s32.totalorder %s161, %s162
      %p171 = scmp.eq.s32.totalorder %s25, 0
      %p172 = por %p170, %p171
      %p173 = scmp.ne.s32.totalorder %s161, %s162
      %p174 = scmp.eq.s32.totalorder %s26, 1
      %p175 = por %p173, %p174
      %p177 = scmp.ne.s32.totalorder %s162, %s176
      %p178 = scmp.eq.s32.totalorder %s26, 0
      %p179 = por %p177, %p178
      %s181 = sadd.s32 %s180, 1
      %p184 = scmp.eq.s32.totalorder %s20, 1
      %p185 = scmp.ne.s32.totalorder %s180, %s182
      %p186 = scmp.eq.s32.totalorder %s20, 0
      %p187 = por %p185, %p186
      %p188 = scmp.ne.s32.totalorder %s180, %s182
      %p189 = scmp.eq.s32.totalorder %s25, 1
      %p190 = por %p188, %p189
      %p191 = scmp.ne.s32.totalorder %s182, %s183
      %p192 = scmp.eq.s32.totalorder %s25, 0
      %p193 = por %p191, %p192
      %p194 = scmp.ne.s32.totalorder %s182, %s183
      %p195 = scmp.eq.s32.totalorder %s26, 1
      %p196 = por %p194, %p195
      %p198 = scmp.ne.s32.totalorder %s183, %s197
      %p199 = scmp.eq.s32.totalorder %s26, 0
      %p200 = por %p198, %p199
      %s202 = sadd.s32 %s201, 1
      %p205 = scmp.eq.s32.totalorder %s20, 1
      %p206 = scmp.ne.s32.totalorder %s201, %s203
      %p207 = scmp.eq.s32.totalorder %s20, 0
      %p208 = por %p206, %p207
      %p209 = scmp.ne.s32.totalorder %s201, %s203
      %p210 = scmp.eq.s32.totalorder %s25, 1
      %p211 = por %p209, %p210
      %p212 = scmp.ne.s32.totalorder %s203, %s204
      %p213 = scmp.eq.s32.totalorder %s25, 0
      %p214 = por %p212, %p213
      %p215 = scmp.ne.s32.totalorder %s203, %s204
      %p216 = scmp.eq.s32.totalorder %s26, 1
      %p217 = por %p215, %p216
      %p219 = scmp.ne.s32.totalorder %s204, %s218
      %p220 = scmp.eq.s32.totalorder %s26, 0
      %p221 = por %p219, %p220
      %s223 = sadd.s32 %s222, 1
      %p226 = scmp.eq.s32.totalorder %s20, 1
      %p227 = scmp.ne.s32.totalorder %s222, %s224
      %p228 = scmp.eq.s32.totalorder %s20, 0
      %p229 = por %p227, %p228
      %p230 = scmp.ne.s32.totalorder %s222, %s224
      %p231 = scmp.eq.s32.totalorder %s25, 1
      %p232 = por %p230, %p231
      %p233 = scmp.ne.s32.totalorder %s224, %s225
      %p234 = scmp.eq.s32.totalorder %s25, 0
      %p235 = por %p233, %p234
      %p236 = scmp.ne.s32.totalorder %s224, %s225
      %p237 = scmp.eq.s32.totalorder %s26, 1
      %p238 = por %p236, %p237
      %p240 = scmp.ne.s32.totalorder %s225, %s239
      %p241 = scmp.eq.s32.totalorder %s26, 0
      %p242 = por %p240, %p241
      %s244 = sadd.s32 %s243, 1
      %p247 = scmp.eq.s32.totalorder %s20, 1
      %p248 = scmp.ne.s32.totalorder %s243, %s245
      %p249 = scmp.eq.s32.totalorder %s20, 0
      %p250 = por %p248, %p249
      %p251 = scmp.ne.s32.totalorder %s243, %s245
      %p252 = scmp.eq.s32.totalorder %s25, 1
      %p253 = por %p251, %p252
      %p254 = scmp.ne.s32.totalorder %s245, %s246
      %p255 = scmp.eq.s32.totalorder %s25, 0
      %p256 = por %p254, %p255
      %p257 = scmp.ne.s32.totalorder %s245, %s246
      %p258 = scmp.eq.s32.totalorder %s26, 1
      %p259 = por %p257, %p258
      %p261 = scmp.ne.s32.totalorder %s246, %s260
      %p262 = scmp.eq.s32.totalorder %s26, 0
      %p263 = por %p261, %p262
      %s264 = ssub.s32 %s20, %s27
      %p265 = scmp.eq.s32.totalorder %s264, 0
      %s267 = sadd.s32 %s266, 1
      %s268 = scalar_select %p265, %s266, %s267
      %p271 = pneg %p265
      %p272 = scmp.eq.s32.totalorder %s20, 1
      %p273 = por %p271, %p272
      %p274 = scmp.ne.s32.totalorder %s266, %s269
      %p275 = scmp.eq.s32.totalorder %s20, 0
      %p276 = por %p274, %p275
      %p277 = scmp.ne.s32.totalorder %s266, %s269
      %p278 = scmp.eq.s32.totalorder %s25, 1
      %p279 = por %p277, %p278
      %p280 = scmp.ne.s32.totalorder %s269, %s270
      %p281 = scmp.eq.s32.totalorder %s25, 0
      %p282 = por %p280, %p281
      %p283 = scmp.ne.s32.totalorder %s269, %s270
      %p284 = scmp.eq.s32.totalorder %s26, 1
      %p285 = por %p283, %p284
      %p287 = scmp.ne.s32.totalorder %s270, %s286
      %p288 = scmp.eq.s32.totalorder %s26, 0
      %p289 = por %p287, %p288
      %p290 = scmp.le.s32.totalorder 1, %s20
      %p291 = scmp.lt.s32.totalorder %s20, 3
      %p292 = pnand %p290, %p291
      %p293 = pneg %p292
      // Predicated region
      $region9: #{lenet_forward.1} parent=5 // pred_check
        _
      $region10: #{lenet_forward.1} parent=5 // pred_check_branch
        %295 = sbr.rel (%p292) target = $region12
      $region11: #{lenet_forward.1} parent=5 // pred_region
        %s296 = ssub.s32 %s20, 1
        // Predicated region
        $region13: #{lenet_forward.1} parent=11 // pred_check
          %p297 = pneg %p67
        $region14: #{lenet_forward.1} parent=11 // pred_check_branch
          %299 = sbr.rel (%p297) target = $region16
        $region15: #{lenet_forward.1} parent=11 // pred_region
          _
        $region16: #{lenet_forward.1} parent=11 // pred_fallthru
          _
        // Predicated region
        $region17: #{lenet_forward.1} parent=11 // pred_check
          %p300 = pneg %p88
        $region18: #{lenet_forward.1} parent=11 // pred_check_branch
          %302 = sbr.rel (%p300) target = $region20
        $region19: #{lenet_forward.1} parent=11 // pred_region
          _
        $region20: #{lenet_forward.1} parent=11 // pred_fallthru
          _
        // Predicated region
        $region21: #{lenet_forward.1} parent=11 // pred_check
          %p303 = pneg %p109
        $region22: #{lenet_forward.1} parent=11 // pred_check_branch
          %305 = sbr.rel (%p303) target = $region24
        $region23: #{lenet_forward.1} parent=11 // pred_region
          _
        $region24: #{lenet_forward.1} parent=11 // pred_fallthru
          _
        // Predicated region
        $region25: #{lenet_forward.1} parent=11 // pred_check
          %p306 = pneg %p130
        $region26: #{lenet_forward.1} parent=11 // pred_check_branch
          %308 = sbr.rel (%p306) target = $region28
        $region27: #{lenet_forward.1} parent=11 // pred_region
          _
        $region28: #{lenet_forward.1} parent=11 // pred_fallthru
          _
        // Predicated region
        $region29: #{lenet_forward.1} parent=11 // pred_check
          %p309 = pneg %p151
        $region30: #{lenet_forward.1} parent=11 // pred_check_branch
          %311 = sbr.rel (%p309) target = $region32
        $region31: #{lenet_forward.1} parent=11 // pred_region
          _
        $region32: #{lenet_forward.1} parent=11 // pred_fallthru
          _
        // Predicated region
        $region33: #{lenet_forward.1} parent=11 // pred_check
          %p312 = pneg %p172
        $region34: #{lenet_forward.1} parent=11 // pred_check_branch
          %314 = sbr.rel (%p312) target = $region36
        $region35: #{lenet_forward.1} parent=11 // pred_region
          _
        $region36: #{lenet_forward.1} parent=11 // pred_fallthru
          _
        // Predicated region
        $region37: #{lenet_forward.1} parent=11 // pred_check
          %p315 = pneg %p193
        $region38: #{lenet_forward.1} parent=11 // pred_check_branch
          %317 = sbr.rel (%p315) target = $region40
        $region39: #{lenet_forward.1} parent=11 // pred_region
          _
        $region40: #{lenet_forward.1} parent=11 // pred_fallthru
          _
        // Predicated region
        $region41: #{lenet_forward.1} parent=11 // pred_check
          %p318 = pneg %p214
        $region42: #{lenet_forward.1} parent=11 // pred_check_branch
          %320 = sbr.rel (%p318) target = $region44
        $region43: #{lenet_forward.1} parent=11 // pred_region
          _
        $region44: #{lenet_forward.1} parent=11 // pred_fallthru
          _
        // Predicated region
        $region45: #{lenet_forward.1} parent=11 // pred_check
          %p321 = pneg %p235
        $region46: #{lenet_forward.1} parent=11 // pred_check_branch
          %323 = sbr.rel (%p321) target = $region48
        $region47: #{lenet_forward.1} parent=11 // pred_region
          _
        $region48: #{lenet_forward.1} parent=11 // pred_fallthru
          _
        // Predicated region
        $region49: #{lenet_forward.1} parent=11 // pred_check
          %p324 = pneg %p256
        $region50: #{lenet_forward.1} parent=11 // pred_check_branch
          %326 = sbr.rel (%p324) target = $region52
        $region51: #{lenet_forward.1} parent=11 // pred_region
          _
        $region52: #{lenet_forward.1} parent=11 // pred_fallthru
          _
      $region12: #{lenet_forward.1} parent=5 // pred_fallthru
        _
      %p327 = scmp.lt.s32.totalorder %s20, 2
      // Predicated region
      $region53: #{lenet_forward.1} parent=5 // pred_check
        %p328 = pneg %p327
      $region54: #{lenet_forward.1} parent=5 // pred_check_branch
        %330 = sbr.rel (%p328) target = $region56
      $region55: #{lenet_forward.1} parent=5 // pred_region
        // Predicated region
        $region57: #{lenet_forward.1} parent=55 // pred_check
          %p331 = pneg %p40
        $region58: #{lenet_forward.1} parent=55 // pred_check_branch
          %333 = sbr.rel (%p331) target = $region60
        $region59: #{lenet_forward.1} parent=55 // pred_region
          %p334 = scmp.lt.s32.totalorder %s20, 1
          %s335 = scalar_select %p334, %s20, 1
          %s336 = smul.addr %s335, 2
          %s337 = smul.addr %s336, 4
          %s338 = scalar_lea.vmem %s0, %s337
        $region60: #{lenet_forward.1} parent=55 // pred_fallthru
          _
      $region56: #{lenet_forward.1} parent=5 // pred_fallthru
        _
      %p339 = scmp.le.s32.totalorder 1, %s20
      %p340 = scmp.lt.s32.totalorder %s20, 3
      %p341 = pnand %p339, %p340
      %p342 = pneg %p341
      // Predicated region
      $region61: #{lenet_forward.1} parent=5 // pred_check
        _
      $region62: #{lenet_forward.1} parent=5 // pred_check_branch
        %344 = sbr.rel (%p341) target = $region64
      $region63: #{lenet_forward.1} parent=5 // pred_region
        %s345 = ssub.s32 %s20, 1
        %p346 = scmp.lt.s32.totalorder %s25, 1
        %s347 = scalar_select %p346, %s25, 1
        %s348 = smul.addr %s347, 2
        %s349 = smul.addr %s348, 4
        %s350 = scalar_lea.vmem %s0, %s349
        %p351 = pneg %p46
        %p352 = pneg %p43
        %p353 = pneg %p67
        %p354 = pneg %p64
        %p355 = pneg %p88
        %p356 = pneg %p85
        %p357 = pneg %p109
        %p358 = pneg %p106
        %p359 = pneg %p130
        %p360 = pneg %p127
        %p361 = pneg %p151
        %p362 = pneg %p148
        %p363 = pneg %p172
        %p364 = pneg %p169
        %p365 = pneg %p193
        %p366 = pneg %p190
        %p367 = pneg %p214
        %p368 = pneg %p211
        %p369 = pneg %p235
        %p370 = pneg %p232
        %p371 = pneg %p256
        %p372 = pneg %p253
        %p373 = pneg %p282
        %p374 = pneg %p279
        %s375 = sand.u32 %s269, 1
        %s376 = scalar_lea.sflag [#allocation7], %s375
        %s377 = sand.u32 %s269, 1
        %s378 = scalar_lea.vmem [#allocation6], %s377
        %p379 = scmp.lt.s32.totalorder %s25, 1
        %s380 = scalar_select %p379, %s25, 1
        %s381 = smul.addr %s380, 2
        %s382 = smul.addr %s381, 4
        %s383 = scalar_lea.vmem %s0, %s382
        %v384 = vld [vmem:[%s383] sm:$0xff]
        %v386 = vrot.slane %v384, 3
        %vm387 = vcmask 1040384
        %v388 = vsel %vm387, %v384, %v386
        %v390 = vlaneseq
        %vm391 = vcmp.ge.s32.totalorder %v390, 0
        %vm392 = vcmp.lt.s32.totalorder %v390, 181
        %vm393 = vmand %vm391, %vm392
        %394 = vst.msk [vmem:[#allocation2] ss:$8 sm:$0x3] %vm393, %v388
        %395 = vst.msk [vmem:[#allocation2] ss:$8 sm:$0x0] %vm393, %v388
        %396 = vst [vmem:[#allocation1] sm:$0xff] %v384
        %s397 = scalar_lea.vmem [#allocation1], 1
        %v398 = vld [vmem:[%s397] ss:$4 sm:$0xff]
        %s400 = scalar_lea.vmem [#allocation2], 1
        %401 = vst.msk [vmem:[%s400] ss:$8 sm:$0x3] %vm393, %v398
        %402 = vst.msk [vmem:[%s400] ss:$8 sm:$0x0] %vm393, %v398
        %403 = vrot.lane.b32.xlu0 %v388, 127
        %v404 = vpop.permute.xlu0 %403
        %v405 = vrot.slane %v404, 1
        %vm406 = vcmask 1039360
        %v407 = vsel %vm406, %v404, %v405
        %s409 = scalar_lea.vmem [#allocation2], 2
        %410 = vst.msk [vmem:[%s409] ss:$8 sm:$0x3] %vm393, %v407
        %411 = vst.msk [vmem:[%s409] ss:$8 sm:$0x0] %vm393, %v407
        %412 = vst [vmem:[#allocation1] sm:$0xff] %v384
        %s413 = scalar_lea.vmem [#allocation1], 2
        %v414 = vld [vmem:[%s413] ss:$4 sm:$0xff]
        %s416 = scalar_lea.vmem [#allocation2], 3
        %417 = vst.msk [vmem:[%s416] ss:$8 sm:$0x3] %vm393, %v414
        %418 = vst.msk [vmem:[%s416] ss:$8 sm:$0x0] %vm393, %v414
        %419 = vst [vmem:[#allocation1] sm:$0xff] %v384
        %s420 = scalar_lea.vmem [#allocation1], 3
        %v421 = vld [vmem:[%s420] ss:$4 sm:$0xff]
        %s423 = scalar_lea.vmem [#allocation2], 4
        %424 = vst.msk [vmem:[%s423] ss:$8 sm:$0x3] %vm393, %v421
        %425 = vst.msk [vmem:[%s423] ss:$8 sm:$0x0] %vm393, %v421
        %426 = vst [vmem:[#allocation1] sm:$0xff] %v384
        %s427 = scalar_lea.vmem [#allocation1], 2
        %v428 = vld [vmem:[%s427] ss:$4 sm:$0xff]
        %429 = vrot.lane.b32.xlu0 %v428, 127
        %v430 = vpop.permute.xlu0 %429
        %v431 = vrot.slane %v430, 1
        %v432 = vsel %vm406, %v430, %v431
        %s434 = scalar_lea.vmem [#allocation2], 5
        %435 = vst.msk [vmem:[%s434] ss:$8 sm:$0x3] %vm393, %v432
        %436 = vst.msk [vmem:[%s434] ss:$8 sm:$0x0] %vm393, %v432
        %437 = vrot.lane.b32.xlu0 %v388, 114
        %v438 = vpop.permute.xlu0 %437
        %v439 = vrot.slane %v438, 1
        %vm440 = vcmask 932864
        %v441 = vsel %vm440, %v438, %v439
        %s443 = scalar_lea.vmem [#allocation2], 6
        %444 = vst.msk [vmem:[%s443] ss:$8 sm:$0x3] %vm393, %v441
        %445 = vst.msk [vmem:[%s443] ss:$8 sm:$0x0] %vm393, %v441
        %446 = vst [vmem:[#allocation1] sm:$0xff] %v384
        %s447 = scalar_lea.vmem [#allocation1], 1
        %v448 = vld [vmem:[%s447] ss:$4 sm:$0xff]
        %449 = vrot.lane.b32.xlu0 %v448, 114
        %v450 = vpop.permute.xlu0 %449
        %v451 = vrot.slane %v450, 1
        %v452 = vsel %vm440, %v450, %v451
        %s454 = scalar_lea.vmem [#allocation2], 7
        %455 = vst.msk [vmem:[%s454] ss:$8 sm:$0x3] %vm393, %v452
        %456 = vst.msk [vmem:[%s454] ss:$8 sm:$0x0] %vm393, %v452
        %457 = vrot.lane.b32.xlu0 %v388, 113
        %v458 = vpop.permute.xlu0 %457
        %v459 = vrot.slane %v458, 1
        %vm460 = vcmask 924672
        %v461 = vsel %vm460, %v458, %v459
        %s463 = scalar_lea.vmem [#allocation2], 64
        %464 = vst.msk [vmem:[%s463] ss:$8 sm:$0x3] %vm393, %v461
        %465 = vst.msk [vmem:[%s463] ss:$8 sm:$0x0] %vm393, %v461
        %466 = vst [vmem:[#allocation1] sm:$0xff] %v384
        %s467 = scalar_lea.vmem [#allocation1], 1
        %v468 = vld [vmem:[%s467] ss:$4 sm:$0xff]
        %s470 = scalar_lea.vmem [#allocation2], 16
        %471 = vst.msk [vmem:[%s470] ss:$8 sm:$0x3] %vm393, %v468
        %472 = vst.msk [vmem:[%s470] ss:$8 sm:$0x0] %vm393, %v468
        %s473 = scalar_lea.vmem [#allocation2], 17
        %474 = vst.msk [vmem:[%s473] ss:$8 sm:$0x3] %vm393, %v407
        %475 = vst.msk [vmem:[%s473] ss:$8 sm:$0x0] %vm393, %v407
        %476 = vst [vmem:[#allocation1] sm:$0xff] %v384
        %s477 = scalar_lea.vmem [#allocation1], 1
        %v478 = vld [vmem:[%s477] ss:$4 sm:$0xff]
        %479 = vrot.lane.b32.xlu0 %v478, 127
        %v480 = vpop.permute.xlu0 %479
        %v481 = vrot.slane %v480, 1
        %v482 = vsel %vm406, %v480, %v481
        %s484 = scalar_lea.vmem [#allocation2], 18
        %485 = vst.msk [vmem:[%s484] ss:$8 sm:$0x3] %vm393, %v482
        %486 = vst.msk [vmem:[%s484] ss:$8 sm:$0x0] %vm393, %v482
        %487 = vst [vmem:[#allocation1] sm:$0xff] %v384
        %s488 = scalar_lea.vmem [#allocation1], 3
        %v489 = vld [vmem:[%s488] ss:$4 sm:$0xff]
        %s491 = scalar_lea.vmem [#allocation2], 19
        %492 = vst.msk [vmem:[%s491] ss:$8 sm:$0x3] %vm393, %v489
        %493 = vst.msk [vmem:[%s491] ss:$8 sm:$0x0] %vm393, %v489
        %494 = vst [vmem:[#allocation1] sm:$0xff] %v384
        %s495 = scalar_lea.vmem [#allocation1], 2
        %v496 = vld [vmem:[%s495] ss:$4 sm:$0xff]
        %497 = vrot.lane.b32.xlu0 %v496, 127
        %v498 = vpop.permute.xlu0 %497
        %v499 = vrot.slane %v498, 1
        %v500 = vsel %vm406, %v498, %v499
        %s502 = scalar_lea.vmem [#allocation2], 20
        %503 = vst.msk [vmem:[%s502] ss:$8 sm:$0x3] %vm393, %v500
        %504 = vst.msk [vmem:[%s502] ss:$8 sm:$0x0] %vm393, %v500
        %505 = vst [vmem:[#allocation1] sm:$0xff] %v384
        %s506 = scalar_lea.vmem [#allocation1], 3
        %v507 = vld [vmem:[%s506] ss:$4 sm:$0xff]
        %508 = vrot.lane.b32.xlu0 %v507, 127
        %v509 = vpop.permute.xlu0 %508
        %v510 = vrot.slane %v509, 1
        %v511 = vsel %vm406, %v509, %v510
        %s513 = scalar_lea.vmem [#allocation2], 21
        %514 = vst.msk [vmem:[%s513] ss:$8 sm:$0x3] %vm393, %v511
        %515 = vst.msk [vmem:[%s513] ss:$8 sm:$0x0] %vm393, %v511
        %516 = vst [vmem:[#allocation1] sm:$0xff] %v384
        %s517 = scalar_lea.vmem [#allocation1], 1
        %v518 = vld [vmem:[%s517] ss:$4 sm:$0xff]
        %519 = vrot.lane.b32.xlu0 %v518, 114
        %v520 = vpop.permute.xlu0 %519
        %v521 = vrot.slane %v520, 1
        %v522 = vsel %vm440, %v520, %v521
        %s524 = scalar_lea.vmem [#allocation2], 22
        %525 = vst.msk [vmem:[%s524] ss:$8 sm:$0x3] %vm393, %v522
        %526 = vst.msk [vmem:[%s524] ss:$8 sm:$0x0] %vm393, %v522
        %s527 = scalar_lea.vmem [#allocation2], 23
        %528 = vst.msk [vmem:[%s527] ss:$8 sm:$0x3] %vm393, %v461
        %529 = vst.msk [vmem:[%s527] ss:$8 sm:$0x0] %vm393, %v461
        %530 = vst [vmem:[#allocation1] sm:$0xff] %v384
        %s531 = scalar_lea.vmem [#allocation1], 1
        %v532 = vld [vmem:[%s531] ss:$4 sm:$0xff]
        %533 = vrot.lane.b32.xlu0 %v532, 113
        %v534 = vpop.permute.xlu0 %533
        %v535 = vrot.slane %v534, 1
        %v536 = vsel %vm460, %v534, %v535
        %s538 = scalar_lea.vmem [#allocation2], 80
        %539 = vst.msk [vmem:[%s538] ss:$8 sm:$0x3] %vm393, %v536
        %540 = vst.msk [vmem:[%s538] ss:$8 sm:$0x0] %vm393, %v536
        %541 = vst [vmem:[#allocation1] sm:$0xff] %v384
        %s542 = scalar_lea.vmem [#allocation1], 2
        %v543 = vld [vmem:[%s542] ss:$4 sm:$0xff]
        %s545 = scalar_lea.vmem [#allocation2], 32
        %546 = vst.msk [vmem:[%s545] ss:$8 sm:$0x3] %vm393, %v543
        %547 = vst.msk [vmem:[%s545] ss:$8 sm:$0x0] %vm393, %v543
        %548 = vst [vmem:[#allocation1] sm:$0xff] %v384
        %s549 = scalar_lea.vmem [#allocation1], 3
        %v550 = vld [vmem:[%s549] ss:$4 sm:$0xff]
        %s552 = scalar_lea.vmem [#allocation2], 33
        %553 = vst.msk [vmem:[%s552] ss:$8 sm:$0x3] %vm393, %v550
        %554 = vst.msk [vmem:[%s552] ss:$8 sm:$0x0] %vm393, %v550
        %555 = vst [vmem:[#allocation1] sm:$0xff] %v384
        %s556 = scalar_lea.vmem [#allocation1], 2
        %v557 = vld [vmem:[%s556] ss:$4 sm:$0xff]
        %558 = vrot.lane.b32.xlu0 %v557, 127
        %v559 = vpop.permute.xlu0 %558
        %v560 = vrot.slane %v559, 1
        %v561 = vsel %vm406, %v559, %v560
        %s563 = scalar_lea.vmem [#allocation2], 34
        %564 = vst.msk [vmem:[%s563] ss:$8 sm:$0x3] %vm393, %v561
        %565 = vst.msk [vmem:[%s563] ss:$8 sm:$0x0] %vm393, %v561
        %s566 = scalar_lea.vmem [#allocation2], 35
        %567 = vst.msk [vmem:[%s566] ss:$8 sm:$0x3] %vm393, %v441
        %568 = vst.msk [vmem:[%s566] ss:$8 sm:$0x0] %vm393, %v441
        %569 = vst [vmem:[#allocation1] sm:$0xff] %v384
        %s570 = scalar_lea.vmem [#allocation1], 1
        %v571 = vld [vmem:[%s570] ss:$4 sm:$0xff]
        %572 = vrot.lane.b32.xlu0 %v571, 114
        %v573 = vpop.permute.xlu0 %572
        %v574 = vrot.slane %v573, 1
        %v575 = vsel %vm440, %v573, %v574
        %s577 = scalar_lea.vmem [#allocation2], 36
        %578 = vst.msk [vmem:[%s577] ss:$8 sm:$0x3] %vm393, %v575
        %579 = vst.msk [vmem:[%s577] ss:$8 sm:$0x0] %vm393, %v575
        %s580 = scalar_lea.vmem [#allocation2], 37
        %581 = vst.msk [vmem:[%s580] ss:$8 sm:$0x3] %vm393, %v461
        %582 = vst.msk [vmem:[%s580] ss:$8 sm:$0x0] %vm393, %v461
        %583 = vst [vmem:[#allocation1] sm:$0xff] %v384
        %s584 = scalar_lea.vmem [#allocation1], 2
        %v585 = vld [vmem:[%s584] ss:$4 sm:$0xff]
        %586 = vrot.lane.b32.xlu0 %v585, 114
        %v587 = vpop.permute.xlu0 %586
        %v588 = vrot.slane %v587, 1
        %v589 = vsel %vm440, %v587, %v588
        %s591 = scalar_lea.vmem [#allocation2], 38
        %592 = vst.msk [vmem:[%s591] ss:$8 sm:$0x3] %vm393, %v589
        %593 = vst.msk [vmem:[%s591] ss:$8 sm:$0x0] %vm393, %v589
        %594 = vst [vmem:[#allocation1] sm:$0xff] %v384
        %s595 = scalar_lea.vmem [#allocation1], 3
        %v596 = vld [vmem:[%s595] ss:$4 sm:$0xff]
        %597 = vrot.lane.b32.xlu0 %v596, 114
        %v598 = vpop.permute.xlu0 %597
        %v599 = vrot.slane %v598, 1
        %v600 = vsel %vm440, %v598, %v599
        %s602 = scalar_lea.vmem [#allocation2], 39
        %603 = vst.msk [vmem:[%s602] ss:$8 sm:$0x3] %vm393, %v600
        %604 = vst.msk [vmem:[%s602] ss:$8 sm:$0x0] %vm393, %v600
        %605 = vst [vmem:[#allocation1] sm:$0xff] %v384
        %s606 = scalar_lea.vmem [#allocation1], 2
        %v607 = vld [vmem:[%s606] ss:$4 sm:$0xff]
        %608 = vrot.lane.b32.xlu0 %v607, 113
        %v609 = vpop.permute.xlu0 %608
        %v610 = vrot.slane %v609, 1
        %v611 = vsel %vm460, %v609, %v610
        %s613 = scalar_lea.vmem [#allocation2], 96
        %614 = vst.msk [vmem:[%s613] ss:$8 sm:$0x3] %vm393, %v611
        %615 = vst.msk [vmem:[%s613] ss:$8 sm:$0x0] %vm393, %v611
        %616 = vst [vmem:[#allocation1] sm:$0xff] %v384
        %s617 = scalar_lea.vmem [#allocation1], 3
        %v618 = vld [vmem:[%s617] ss:$4 sm:$0xff]
        %s620 = scalar_lea.vmem [#allocation2], 48
        %621 = vst.msk [vmem:[%s620] ss:$8 sm:$0x3] %vm393, %v618
        %622 = vst.msk [vmem:[%s620] ss:$8 sm:$0x0] %vm393, %v618
        %623 = vst [vmem:[#allocation1] sm:$0xff] %v384
        %s624 = scalar_lea.vmem [#allocation1], 2
        %v625 = vld [vmem:[%s624] ss:$4 sm:$0xff]
        %626 = vrot.lane.b32.xlu0 %v625, 127
        %v627 = vpop.permute.xlu0 %626
        %v628 = vrot.slane %v627, 1
        %v629 = vsel %vm406, %v627, %v628
        %s631 = scalar_lea.vmem [#allocation2], 49
        %632 = vst.msk [vmem:[%s631] ss:$8 sm:$0x3] %vm393, %v629
        %633 = vst.msk [vmem:[%s631] ss:$8 sm:$0x0] %vm393, %v629
        %634 = vst [vmem:[#allocation1] sm:$0xff] %v384
        %s635 = scalar_lea.vmem [#allocation1], 3
        %v636 = vld [vmem:[%s635] ss:$4 sm:$0xff]
        %637 = vrot.lane.b32.xlu0 %v636, 127
        %v638 = vpop.permute.xlu0 %637
        %v639 = vrot.slane %v638, 1
        %v640 = vsel %vm406, %v638, %v639
        %s642 = scalar_lea.vmem [#allocation2], 50
        %643 = vst.msk [vmem:[%s642] ss:$8 sm:$0x3] %vm393, %v640
        %644 = vst.msk [vmem:[%s642] ss:$8 sm:$0x0] %vm393, %v640
        %645 = vst [vmem:[#allocation1] sm:$0xff] %v384
        %s646 = scalar_lea.vmem [#allocation1], 1
        %v647 = vld [vmem:[%s646] ss:$4 sm:$0xff]
        %648 = vrot.lane.b32.xlu0 %v647, 114
        %v649 = vpop.permute.xlu0 %648
        %v650 = vrot.slane %v649, 1
        %v651 = vsel %vm440, %v649, %v650
        %s653 = scalar_lea.vmem [#allocation2], 51
        %654 = vst.msk [vmem:[%s653] ss:$8 sm:$0x3] %vm393, %v651
        %655 = vst.msk [vmem:[%s653] ss:$8 sm:$0x0] %vm393, %v651
        %s656 = scalar_lea.vmem [#allocation2], 52
        %657 = vst.msk [vmem:[%s656] ss:$8 sm:$0x3] %vm393, %v461
        %658 = vst.msk [vmem:[%s656] ss:$8 sm:$0x0] %vm393, %v461
        %659 = vst [vmem:[#allocation1] sm:$0xff] %v384
        %s660 = scalar_lea.vmem [#allocation1], 1
        %v661 = vld [vmem:[%s660] ss:$4 sm:$0xff]
        %662 = vrot.lane.b32.xlu0 %v661, 113
        %v663 = vpop.permute.xlu0 %662
        %v664 = vrot.slane %v663, 1
        %v665 = vsel %vm460, %v663, %v664
        %s667 = scalar_lea.vmem [#allocation2], 53
        %668 = vst.msk [vmem:[%s667] ss:$8 sm:$0x3] %vm393, %v665
        %669 = vst.msk [vmem:[%s667] ss:$8 sm:$0x0] %vm393, %v665
        %670 = vst [vmem:[#allocation1] sm:$0xff] %v384
        %s671 = scalar_lea.vmem [#allocation1], 3
        %v672 = vld [vmem:[%s671] ss:$4 sm:$0xff]
        %673 = vrot.lane.b32.xlu0 %v672, 114
        %v674 = vpop.permute.xlu0 %673
        %v675 = vrot.slane %v674, 1
        %v676 = vsel %vm440, %v674, %v675
        %s678 = scalar_lea.vmem [#allocation2], 54
        %679 = vst.msk [vmem:[%s678] ss:$8 sm:$0x3] %vm393, %v676
        %680 = vst.msk [vmem:[%s678] ss:$8 sm:$0x0] %vm393, %v676
        %681 = vst [vmem:[#allocation1] sm:$0xff] %v384
        %s682 = scalar_lea.vmem [#allocation1], 2
        %v683 = vld [vmem:[%s682] ss:$4 sm:$0xff]
        %684 = vrot.lane.b32.xlu0 %v683, 113
        %v685 = vpop.permute.xlu0 %684
        %v686 = vrot.slane %v685, 1
        %v687 = vsel %vm460, %v685, %v686
        %s689 = scalar_lea.vmem [#allocation2], 55
        %690 = vst.msk [vmem:[%s689] ss:$8 sm:$0x3] %vm393, %v687
        %691 = vst.msk [vmem:[%s689] ss:$8 sm:$0x0] %vm393, %v687
        %692 = vst [vmem:[#allocation1] sm:$0xff] %v384
        %s693 = scalar_lea.vmem [#allocation1], 3
        %v694 = vld [vmem:[%s693] ss:$4 sm:$0xff]
        %695 = vrot.lane.b32.xlu0 %v694, 113
        %v696 = vpop.permute.xlu0 %695
        %v697 = vrot.slane %v696, 1
        %v698 = vsel %vm460, %v696, %v697
        %s700 = scalar_lea.vmem [#allocation2], 112
        %701 = vst.msk [vmem:[%s700] ss:$8 sm:$0x3] %vm393, %v698
        %702 = vst.msk [vmem:[%s700] ss:$8 sm:$0x0] %vm393, %v698
        %v703 = vld [vmem:[%s1] sm:$0xff]
        %v704 = vld [vmem:[#allocation2] sm:$0xff]
        %v705 = vld [vmem:[#allocation2 + $0x8] sm:$0xff]
        %v706 = vld [vmem:[#allocation2 + $0x10] sm:$0xff]
        %v707 = vld [vmem:[#allocation2 + $0x18] sm:$0xff]
        %v708 = vld [vmem:[#allocation2 + $0x20] sm:$0xff]
        %v709 = vld [vmem:[#allocation2 + $0x28] sm:$0xff]
        %v710 = vld [vmem:[#allocation2 + $0x30] sm:$0xff]
        %v711 = vld [vmem:[#allocation2 + $0x38] sm:$0xff]
        %v712 = vld [vmem:[#allocation2 + $0x40] sm:$0x1]
        %v713 = vld [vmem:[#allocation2 + $0x48] sm:$0x1]
        %v714 = vld [vmem:[#allocation2 + $0x50] sm:$0x1]
        %v715 = vld [vmem:[#allocation2 + $0x58] sm:$0x1]
        %v716 = vld [vmem:[#allocation2 + $0x60] sm:$0x1]
        %v717 = vld [vmem:[#allocation2 + $0x68] sm:$0x1]
        %v718 = vld [vmem:[#allocation2 + $0x70] sm:$0x1]
        %v719 = vld [vmem:[#allocation2 + $0x78] sm:$0x1]
        %vm720 = vcmask 72704
        %v722 = vsel %vm720, %v703, 0
        %v725 = vsel %vm387, %v712, 0
        %v728 = vsel %vm387, %v713, 0
        %v731 = vsel %vm387, %v714, 0
        %v734 = vsel %vm387, %v715, 0
        %v737 = vsel %vm387, %v716, 0
        %v740 = vsel %vm387, %v717, 0
        %v743 = vsel %vm387, %v718, 0
        %v746 = vsel %vm387, %v719, 0
        %748 = vmatpush.msra.mxu0 0.0
        %749 = vmatpush.msra.mxu0 0.0
        %750 = vmatpush.msra.mxu0 0.0
        %751 = vmatpush.msra.mxu0 0.0
        %752 = vmatpush.msra.mxu0 0.0
        %753 = vmatpush.msra.mxu0 0.0
        %754 = vmatpush.msra.mxu0 0.0
        %755 = vmatpush.msra.mxu0 0.0
        %756 = vmatpush.msra.mxu0 0.0
        %757 = vmatpush.msra.mxu0 0.0
        %758 = vmatpush.msra.mxu0 0.0
        %759 = vmatpush.msra.mxu0 0.0
        %760 = vmatpush.msra.mxu0 0.0
        %761 = vmatpush.msra.mxu0 0.0
        %762 = vmatpush.msra.mxu0 %v725
        %763 = vmatpush.msra.mxu0 %v704
        %764 = vmatmul.f32.gmra.mxu0 %v722
        %v765 = vpop.f32.mrf.mxu0
        %v766 = vadd.f32 0.0, %v765
        %767 = vdwg.mxu0
        %768 = vmatpush.msra.mxu0 0.0
        %769 = vmatpush.msra.mxu0 0.0
        %770 = vmatpush.msra.mxu0 0.0
        %771 = vmatpush.msra.mxu0 0.0
        %772 = vmatpush.msra.mxu0 0.0
        %773 = vmatpush.msra.mxu0 0.0
        %774 = vmatpush.msra.mxu0 0.0
        %775 = vmatpush.msra.mxu0 0.0
        %776 = vmatpush.msra.mxu0 0.0
        %777 = vmatpush.msra.mxu0 0.0
        %778 = vmatpush.msra.mxu0 0.0
        %779 = vmatpush.msra.mxu0 0.0
        %780 = vmatpush.msra.mxu0 0.0
        %781 = vmatpush.msra.mxu0 0.0
        %782 = vmatpush.msra.mxu0 %v728
        %783 = vmatpush.msra.mxu0 %v705
        %784 = vmatmul.f32.gmra.mxu0 %v722
        %v785 = vpop.f32.mrf.mxu0
        %v786 = vadd.f32 0.0, %v785
        %787 = vdwg.mxu0
        %788 = vmatpush.msra.mxu0 0.0
        %789 = vmatpush.msra.mxu0 0.0
        %790 = vmatpush.msra.mxu0 0.0
        %791 = vmatpush.msra.mxu0 0.0
        %792 = vmatpush.msra.mxu0 0.0
        %793 = vmatpush.msra.mxu0 0.0
        %794 = vmatpush.msra.mxu0 0.0
        %795 = vmatpush.msra.mxu0 0.0
        %796 = vmatpush.msra.mxu0 0.0
        %797 = vmatpush.msra.mxu0 0.0
        %798 = vmatpush.msra.mxu0 0.0
        %799 = vmatpush.msra.mxu0 0.0
        %800 = vmatpush.msra.mxu0 0.0
        %801 = vmatpush.msra.mxu0 0.0
        %802 = vmatpush.msra.mxu0 %v731
        %803 = vmatpush.msra.mxu0 %v706
        %804 = vmatmul.f32.gmra.mxu0 %v722
        %v805 = vpop.f32.mrf.mxu0
        %v806 = vadd.f32 0.0, %v805
        %807 = vdwg.mxu0
        %808 = vmatpush.msra.mxu0 0.0
        %809 = vmatpush.msra.mxu0 0.0
        %810 = vmatpush.msra.mxu0 0.0
        %811 = vmatpush.msra.mxu0 0.0
        %812 = vmatpush.msra.mxu0 0.0
        %813 = vmatpush.msra.mxu0 0.0
        %814 = vmatpush.msra.mxu0 0.0
        %815 = vmatpush.msra.mxu0 0.0
        %816 = vmatpush.msra.mxu0 0.0
        %817 = vmatpush.msra.mxu0 0.0
        %818 = vmatpush.msra.mxu0 0.0
        %819 = vmatpush.msra.mxu0 0.0
        %820 = vmatpush.msra.mxu0 0.0
        %821 = vmatpush.msra.mxu0 0.0
        %822 = vmatpush.msra.mxu0 %v734
        %823 = vmatpush.msra.mxu0 %v707
        %824 = vmatmul.f32.gmra.mxu0 %v722
        %v825 = vpop.f32.mrf.mxu0
        %v826 = vadd.f32 0.0, %v825
        %827 = vdwg.mxu0
        %828 = vmatpush.msra.mxu0 0.0
        %829 = vmatpush.msra.mxu0 0.0
        %830 = vmatpush.msra.mxu0 0.0
        %831 = vmatpush.msra.mxu0 0.0
        %832 = vmatpush.msra.mxu0 0.0
        %833 = vmatpush.msra.mxu0 0.0
        %834 = vmatpush.msra.mxu0 0.0
        %835 = vmatpush.msra.mxu0 0.0
        %836 = vmatpush.msra.mxu0 0.0
        %837 = vmatpush.msra.mxu0 0.0
        %838 = vmatpush.msra.mxu0 0.0
        %839 = vmatpush.msra.mxu0 0.0
        %840 = vmatpush.msra.mxu0 0.0
        %841 = vmatpush.msra.mxu0 0.0
        %842 = vmatpush.msra.mxu0 %v737
        %843 = vmatpush.msra.mxu0 %v708
        %844 = vmatmul.f32.gmra.mxu0 %v722
        %v845 = vpop.f32.mrf.mxu0
        %v846 = vadd.f32 0.0, %v845
        %847 = vdwg.mxu0
        %848 = vmatpush.msra.mxu0 0.0
        %849 = vmatpush.msra.mxu0 0.0
        %850 = vmatpush.msra.mxu0 0.0
        %851 = vmatpush.msra.mxu0 0.0
        %852 = vmatpush.msra.mxu0 0.0
        %853 = vmatpush.msra.mxu0 0.0
        %854 = vmatpush.msra.mxu0 0.0
        %855 = vmatpush.msra.mxu0 0.0
        %856 = vmatpush.msra.mxu0 0.0
        %857 = vmatpush.msra.mxu0 0.0
        %858 = vmatpush.msra.mxu0 0.0
        %859 = vmatpush.msra.mxu0 0.0
        %860 = vmatpush.msra.mxu0 0.0
        %861 = vmatpush.msra.mxu0 0.0
        %862 = vmatpush.msra.mxu0 %v740
        %863 = vmatpush.msra.mxu0 %v709
        %864 = vmatmul.f32.gmra.mxu0 %v722
        %v865 = vpop.f32.mrf.mxu0
        %v866 = vadd.f32 0.0, %v865
        %867 = vdwg.mxu0
        %868 = vmatpush.msra.mxu0 0.0
        %869 = vmatpush.msra.mxu0 0.0
        %870 = vmatpush.msra.mxu0 0.0
        %871 = vmatpush.msra.mxu0 0.0
        %872 = vmatpush.msra.mxu0 0.0
        %873 = vmatpush.msra.mxu0 0.0
        %874 = vmatpush.msra.mxu0 0.0
        %875 = vmatpush.msra.mxu0 0.0
        %876 = vmatpush.msra.mxu0 0.0
        %877 = vmatpush.msra.mxu0 0.0
        %878 = vmatpush.msra.mxu0 0.0
        %879 = vmatpush.msra.mxu0 0.0
        %880 = vmatpush.msra.mxu0 0.0
        %881 = vmatpush.msra.mxu0 0.0
        %882 = vmatpush.msra.mxu0 %v743
        %883 = vmatpush.msra.mxu0 %v710
        %884 = vmatmul.f32.gmra.mxu0 %v722
        %v885 = vpop.f32.mrf.mxu0
        %v886 = vadd.f32 0.0, %v885
        %887 = vdwg.mxu0
        %888 = vmatpush.msra.mxu0 0.0
        %889 = vmatpush.msra.mxu0 0.0
        %890 = vmatpush.msra.mxu0 0.0
        %891 = vmatpush.msra.mxu0 0.0
        %892 = vmatpush.msra.mxu0 0.0
        %893 = vmatpush.msra.mxu0 0.0
        %894 = vmatpush.msra.mxu0 0.0
        %895 = vmatpush.msra.mxu0 0.0
        %896 = vmatpush.msra.mxu0 0.0
        %897 = vmatpush.msra.mxu0 0.0
        %898 = vmatpush.msra.mxu0 0.0
        %899 = vmatpush.msra.mxu0 0.0
        %900 = vmatpush.msra.mxu0 0.0
        %901 = vmatpush.msra.mxu0 0.0
        %902 = vmatpush.msra.mxu0 %v746
        %903 = vmatpush.msra.mxu0 %v711
        %904 = vmatmul.f32.gmra.mxu0 %v722
        %v905 = vpop.f32.mrf.mxu0
        %v906 = vadd.f32 0.0, %v905
        %907 = vdwg.mxu0
        %v908 = vmax.f32 %v766, %v806
        %v909 = vmax.f32 %v786, %v826
        %v910 = vmax.f32 %v846, %v886
        %v911 = vmax.f32 %v866, %v906
        %v912 = vmax.f32 %v908, %v910
        %v913 = vmax.f32 %v909, %v911
        %v914 = vld [vmem:[%s2] sm:$0xff]
        %916 = vset.pattern.permute.xlu0 0
        %917 = vperm.xlu0 %916, %v914
        %v918 = vpop.permute.xlu0 %917
        %v920 = vadd.f32 %v912, %v918
        %v921 = vadd.f32 %v913, %v918
        %v922 = vmax.f32 %v920, 0.0
        %v923 = vmax.f32 %v921, 0.0
        %924 = vst [vmem:[#allocation3] sm:$0xff] %v922
        %vm925 = vcmask 187392
        %926 = vst.msk [vmem:[#allocation3 + $0x8] sm:$0xff] %vm925, %v923
        %929 = vrot.lane.b32.xlu0 %v922, 127
        %v930 = vpop.permute.xlu0 %929
        %931 = vrot.lane.b32.xlu0 %v923, 127
        %v932 = vpop.permute.xlu0 %931
        %v933 = vsel %vm406, %v930, %v932
        %936 = vst [vmem:[#allocation3 + $0x10] sm:$0xff] %v933
        %937 = vst.msk [vmem:[#allocation3 + $0x18] sm:$0xff] %vm925, %v932
        %938 = vrot.lane.b32.xlu0 %v922, 126
        %v939 = vpop.permute.xlu0 %938
        %940 = vrot.lane.b32.xlu0 %v923, 126
        %v941 = vpop.permute.xlu0 %940
        %vm942 = vcmask 1031168
        %v943 = vsel %vm942, %v939, %v941
        %946 = vst [vmem:[#allocation3 + $0x20] sm:$0xff] %v943
        %947 = vst.msk [vmem:[#allocation3 + $0x28] sm:$0xff] %vm925, %v941
        %948 = vrot.lane.b32.xlu0 %v922, 114
        %v949 = vpop.permute.xlu0 %948
        %950 = vrot.lane.b32.xlu0 %v923, 114
        %v951 = vpop.permute.xlu0 %950
        %v952 = vsel %vm440, %v949, %v951
        %955 = vst [vmem:[#allocation3 + $0x30] sm:$0xff] %v952
        %956 = vst.msk [vmem:[#allocation3 + $0x38] sm:$0xff] %vm925, %v951
        %957 = vrot.lane.b32.xlu0 %v922, 113
        %v958 = vpop.permute.xlu0 %957
        %959 = vrot.lane.b32.xlu0 %v923, 113
        %v960 = vpop.permute.xlu0 %959
        %v961 = vsel %vm460, %v958, %v960
        %964 = vst [vmem:[#allocation3 + $0x40] sm:$0xff] %v961
        %965 = vst.msk [vmem:[#allocation3 + $0x48] sm:$0xff] %vm925, %v960
        %966 = vrot.lane.b32.xlu0 %v922, 112
        %v967 = vpop.permute.xlu0 %966
        %968 = vrot.lane.b32.xlu0 %v923, 112
        %v969 = vpop.permute.xlu0 %968
        %vm970 = vcmask 916480
        %v971 = vsel %vm970, %v967, %v969
        %974 = vst [vmem:[#allocation3 + $0x50] sm:$0xff] %v971
        %975 = vst.msk [vmem:[#allocation3 + $0x58] sm:$0xff] %vm925, %v969
        %976 = vrot.lane.b32.xlu0 %v922, 100
        %v977 = vpop.permute.xlu0 %976
        %978 = vrot.lane.b32.xlu0 %v923, 100
        %v979 = vpop.permute.xlu0 %978
        %vm980 = vcmask 818176
        %v981 = vsel %vm980, %v977, %v979
        %984 = vst [vmem:[#allocation3 + $0x60] sm:$0xff] %v981
        %985 = vst.msk [vmem:[#allocation3 + $0x68] sm:$0xff] %vm925, %v979
        %986 = vrot.lane.b32.xlu0 %v922, 99
        %v987 = vpop.permute.xlu0 %986
        %988 = vrot.lane.b32.xlu0 %v923, 99
        %v989 = vpop.permute.xlu0 %988
        %vm990 = vcmask 809984
        %v991 = vsel %vm990, %v987, %v989
        %994 = vst [vmem:[#allocation3 + $0x70] sm:$0xff] %v991
        %995 = vst.msk [vmem:[#allocation3 + $0x78] sm:$0xff] %vm925, %v989
        %996 = vrot.lane.b32.xlu0 %v922, 98
        %v997 = vpop.permute.xlu0 %996
        %998 = vrot.lane.b32.xlu0 %v923, 98
        %v999 = vpop.permute.xlu0 %998
        %vm1000 = vcmask 801792
        %v1001 = vsel %vm1000, %v997, %v999
        %1004 = vst [vmem:[#allocation3 + $0x80] sm:$0xff] %v1001
        %1005 = vst.msk [vmem:[#allocation3 + $0x88] sm:$0xff] %vm925, %v999
        %v1006 = vld [vmem:[%s3] sm:$0xff]
        %v1007 = vld [vmem:[%s3 + $0x8] sm:$0xff]
        %v1008 = vld [vmem:[#allocation3] sm:$0xff]
        %v1009 = vld [vmem:[#allocation3 + $0x8] sm:$0xff]
        %v1010 = vld [vmem:[#allocation3 + $0x10] sm:$0xff]
        %v1011 = vld [vmem:[#allocation3 + $0x18] sm:$0xff]
        %v1012 = vld [vmem:[#allocation3 + $0x20] sm:$0xff]
        %v1013 = vld [vmem:[#allocation3 + $0x28] sm:$0xff]
        %v1014 = vld [vmem:[#allocation3 + $0x30] sm:$0xff]
        %v1015 = vld [vmem:[#allocation3 + $0x38] sm:$0xff]
        %v1016 = vld [vmem:[#allocation3 + $0x40] sm:$0xff]
        %v1017 = vld [vmem:[#allocation3 + $0x48] sm:$0xff]
        %v1018 = vld [vmem:[#allocation3 + $0x50] sm:$0xff]
        %v1019 = vld [vmem:[#allocation3 + $0x58] sm:$0xff]
        %v1020 = vld [vmem:[#allocation3 + $0x60] sm:$0xff]
        %v1021 = vld [vmem:[#allocation3 + $0x68] sm:$0xff]
        %v1022 = vld [vmem:[#allocation3 + $0x70] sm:$0xff]
        %v1023 = vld [vmem:[#allocation3 + $0x78] sm:$0xff]
        %v1024 = vld [vmem:[#allocation3 + $0x80] sm:$0xff]
        %v1025 = vld [vmem:[#allocation3 + $0x88] sm:$0xff]
        %v1026 = vld [vmem:[%s4] sm:$0xff]
        %v1027 = vld [vmem:[%s4 + $0x8] sm:$0xff]
        %1029 = vset.pattern.permute.xlu0 0
        %1030 = vperm.xlu0 %1029, %v1026
        %v1031 = vpop.permute.xlu0 %1030
        %1034 = vset.pattern.permute.xlu0 0
        %1035 = vperm.xlu0 %1034, %v1027
        %v1036 = vpop.permute.xlu0 %1035
        %vm1038 = vcmask 588800
        %v1040 = vsel %vm1038, %v1006, 0
        %v1043 = vsel %vm1038, %v1007, 0
        %1045 = vmatpush.msra.mxu0 0.0
        %1046 = vmatpush.msra.mxu0 0.0
        %1047 = vmatpush.msra.mxu0 0.0
        %1048 = vmatpush.msra.mxu0 0.0
        %1049 = vmatpush.msra.mxu0 0.0
        %1050 = vmatpush.msra.mxu0 0.0
        %1051 = vmatpush.msra.mxu0 0.0
        %1052 = vmatpush.msra.mxu0 %v1024
        %1053 = vmatpush.msra.mxu0 %v1022
        %1054 = vmatpush.msra.mxu0 %v1020
        %1055 = vmatpush.msra.mxu0 %v1018
        %1056 = vmatpush.msra.mxu0 %v1016
        %1057 = vmatpush.msra.mxu0 %v1014
        %1058 = vmatpush.msra.mxu0 %v1012
        %1059 = vmatpush.msra.mxu0 %v1010
        %1060 = vmatpush.msra.mxu0 %v1008
        %1061 = vmatmul.f32.gmra.mxu0 %v1040
        %v1062 = vpop.f32.mrf.mxu0
        %v1063 = vadd.f32 %v1031, %v1062
        %1064 = vmatmul.f32.gmra.mxu0 %v1043
        %v1065 = vpop.f32.mrf.mxu0
        %v1066 = vadd.f32 %v1036, %v1065
        %1067 = vdwg.mxu0
        %1068 = vmatpush.msra.mxu0 0.0
        %1069 = vmatpush.msra.mxu0 0.0
        %1070 = vmatpush.msra.mxu0 0.0
        %1071 = vmatpush.msra.mxu0 0.0
        %1072 = vmatpush.msra.mxu0 0.0
        %1073 = vmatpush.msra.mxu0 0.0
        %1074 = vmatpush.msra.mxu0 0.0
        %1075 = vmatpush.msra.mxu0 %v1025
        %1076 = vmatpush.msra.mxu0 %v1023
        %1077 = vmatpush.msra.mxu0 %v1021
        %1078 = vmatpush.msra.mxu0 %v1019
        %1079 = vmatpush.msra.mxu0 %v1017
        %1080 = vmatpush.msra.mxu0 %v1015
        %1081 = vmatpush.msra.mxu0 %v1013
        %1082 = vmatpush.msra.mxu0 %v1011
        %1083 = vmatpush.msra.mxu0 %v1009
        %1084 = vmatmul.f32.gmra.mxu0 %v1040
        %v1085 = vpop.f32.mrf.mxu0
        %v1086 = vadd.f32 %v1031, %v1085
        %1087 = vmatmul.f32.gmra.mxu0 %v1043
        %v1088 = vpop.f32.mrf.mxu0
        %v1089 = vadd.f32 %v1036, %v1088
        %1090 = vdwg.mxu0
        %v1091 = vmax.f32 %v1063, 0.0
        %v1092 = vmax.f32 %v1086, 0.0
        %v1093 = vmax.f32 %v1066, 0.0
        %v1094 = vmax.f32 %v1089, 0.0
        %1097 = vrot.lane.b32.xlu0 %v1091, 127
        %v1098 = vpop.permute.xlu0 %1097
        %1099 = vrot.lane.b32.xlu0 %v1093, 127
        %v1100 = vpop.permute.xlu0 %1099
        %v1103 = vmax.f32 %v1091, %v1098
        %v1104 = vmax.f32 %v1093, %v1100
        %1107 = vrot.lane.b32.xlu0 %v1092, 127
        %v1108 = vpop.permute.xlu0 %1107
        %1109 = vrot.lane.b32.xlu0 %v1094, 127
        %v1110 = vpop.permute.xlu0 %1109
        %v1111 = vsel %vm406, %v1098, %v1108
        %v1112 = vsel %vm406, %v1100, %v1110
        %v1117 = vmax.f32 %v1091, %v1111
        %v1118 = vmax.f32 %v1092, %v1108
        %v1119 = vmax.f32 %v1093, %v1112
        %v1120 = vmax.f32 %v1094, %v1110
        %1125 = vrot.lane.b32.xlu0 %v1117, 114
        %v1126 = vpop.permute.xlu0 %1125
        %1127 = vrot.lane.b32.xlu0 %v1118, 114
        %v1128 = vpop.permute.xlu0 %1127
        %1129 = vrot.lane.b32.xlu0 %v1119, 114
        %v1130 = vpop.permute.xlu0 %1129
        %1131 = vrot.lane.b32.xlu0 %v1120, 114
        %v1132 = vpop.permute.xlu0 %1131
        %v1133 = vsel %vm440, %v1126, %v1128
        %v1134 = vsel %vm440, %v1130, %v1132
        %v1137 = vmax.f32 %v1103, %v1133
        %v1138 = vmax.f32 %v1104, %v1134
        %v1139 = vlaneseq
        %v1140 = vshrl.u32 %v1139, 7
        %v1141 = vadd.s32 %v1140, 8
        %v1142 = vadd.s32 %v1140, 16
        %v1143 = vadd.s32 %v1140, 24
        %v1144 = vadd.s32 %v1140, 32
        %v1145 = vadd.s32 %v1140, 40
        %v1146 = vadd.s32 %v1140, 48
        %v1147 = vadd.s32 %v1140, 56
        %v1148 = vadd.s32 %v1140, 64
        %v1149 = vadd.s32 %v1140, 72
        %v1150 = vadd.s32 %v1140, 80
        %v1151 = vadd.s32 %v1140, 88
        %v1152 = vadd.s32 %v1140, 96
        %v1153 = vadd.s32 %v1140, 104
        %v1154 = vadd.s32 %v1140, 112
        %v1155 = vadd.s32 %v1140, 120
        %v1156 = vlaneseq
        %v1157 = vand.u32 %v1156, 127
        %vm1158 = vcmp.ge.s32.totalorder %v1157, 5
        %v1159 = vsel %vm1158, 1, 0
        %vm1160 = vcmp.ge.s32.totalorder %v1157, 10
        %v1161 = vsel %vm1160, 1, 0
        %v1162 = vadd.s32 %v1159, %v1161
        %vm1163 = vcmp.ge.s32.totalorder %v1157, 15
        %v1164 = vsel %vm1163, 1, 0
        %v1165 = vadd.s32 %v1162, %v1164
        %vm1166 = vcmp.ge.s32.totalorder %v1157, 20
        %v1167 = vsel %vm1166, 1, 0
        %v1168 = vadd.s32 %v1165, %v1167
        %v1169 = vmul.u32 %v1168, 5
        %v1170 = vsub.s32 %v1157, %v1169
        %v1171 = vmul.u32 %v1168, 28
        %v1172 = vmul.u32 %v1170, 2
        %v1173 = vadd.s32 %v1171, %v1172
        %vm1174 = vcmp.eq.s32.totalorder %v1140, %v1173
        %vm1175 = vcmp.eq.s32.totalorder %v1141, %v1173
        %vm1176 = vcmp.eq.s32.totalorder %v1142, %v1173
        %vm1177 = vcmp.eq.s32.totalorder %v1143, %v1173
        %vm1178 = vcmp.eq.s32.totalorder %v1144, %v1173
        %vm1179 = vcmp.eq.s32.totalorder %v1145, %v1173
        %vm1180 = vcmp.eq.s32.totalorder %v1146, %v1173
        %vm1181 = vcmp.eq.s32.totalorder %v1147, %v1173
        %vm1182 = vcmp.eq.s32.totalorder %v1148, %v1173
        %vm1183 = vcmp.eq.s32.totalorder %v1149, %v1173
        %vm1184 = vcmp.eq.s32.totalorder %v1150, %v1173
        %vm1185 = vcmp.eq.s32.totalorder %v1151, %v1173
        %vm1186 = vcmp.eq.s32.totalorder %v1152, %v1173
        %vm1187 = vcmp.eq.s32.totalorder %v1153, %v1173
        %vm1188 = vcmp.eq.s32.totalorder %v1154, %v1173
        %vm1189 = vcmp.eq.s32.totalorder %v1155, %v1173
        %v1190 = vsel %vm1174, 1, 0
        %v1191 = vsel %vm1175, 1, 0
        %v1192 = vsel %vm1176, 1, 0
        %v1193 = vsel %vm1177, 1, 0
        %v1194 = vsel %vm1178, 1, 0
        %v1195 = vsel %vm1179, 1, 0
        %v1196 = vsel %vm1180, 1, 0
        %v1197 = vsel %vm1181, 1, 0
        %v1198 = vsel %vm1182, 1, 0
        %v1199 = vsel %vm1183, 1, 0
        %v1200 = vsel %vm1184, 1, 0
        %v1201 = vsel %vm1185, 1, 0
        %v1202 = vsel %vm1186, 1, 0
        %v1203 = vsel %vm1187, 1, 0
        %v1204 = vsel %vm1188, 1, 0
        %v1205 = vsel %vm1189, 1, 0
        %v1206 = vcvt.s32.f32 %v1190
        %v1207 = vcvt.s32.f32 %v1191
        %v1208 = vcvt.s32.f32 %v1192
        %v1209 = vcvt.s32.f32 %v1193
        %v1210 = vcvt.s32.f32 %v1194
        %v1211 = vcvt.s32.f32 %v1195
        %v1212 = vcvt.s32.f32 %v1196
        %v1213 = vcvt.s32.f32 %v1197
        %v1214 = vcvt.s32.f32 %v1198
        %v1215 = vcvt.s32.f32 %v1199
        %v1216 = vcvt.s32.f32 %v1200
        %v1217 = vcvt.s32.f32 %v1201
        %v1218 = vcvt.s32.f32 %v1202
        %v1219 = vcvt.s32.f32 %v1203
        %v1220 = vcvt.s32.f32 %v1204
        %v1221 = vcvt.s32.f32 %v1205
        %vm1222 = vcmask 990208
        %v1224 = vsel %vm1222, %v1137, 0
        %v1227 = vsel %vm1222, %v1138, 0
        %v1230 = vsel %vm387, %v1221, 0
        %1232 = vmatpush.msra.mxu0 %v1230
        %1233 = vmatpush.msra.mxu0 %v1220
        %1234 = vmatpush.msra.mxu0 %v1219
        %1235 = vmatpush.msra.mxu0 %v1218
        %1236 = vmatpush.msra.mxu0 %v1217
        %1237 = vmatpush.msra.mxu0 %v1216
        %1238 = vmatpush.msra.mxu0 %v1215
        %1239 = vmatpush.msra.mxu0 %v1214
        %1240 = vmatpush.msra.mxu0 %v1213
        %1241 = vmatpush.msra.mxu0 %v1212
        %1242 = vmatpush.msra.mxu0 %v1211
        %1243 = vmatpush.msra.mxu0 %v1210
        %1244 = vmatpush.msra.mxu0 %v1209
        %1245 = vmatpush.msra.mxu0 %v1208
        %1246 = vmatpush.msra.mxu0 %v1207
        %1247 = vmatpush.msra.mxu0 %v1206
        %1248 = vmatmul.f32.gmra.mxu0 %v1224
        %v1249 = vpop.f32.mrf.mxu0
        %v1250 = vadd.f32 0.0, %v1249
        %1251 = vmatmul.f32.gmra.mxu0 %v1227
        %v1252 = vpop.f32.mrf.mxu0
        %v1253 = vadd.f32 0.0, %v1252
        %1254 = vdwg.mxu0
        %vm1255 = vcmask 203776
        %1256 = vst.msk [vmem:[#allocation4] sm:$0xff] %vm1255, %v1250
        %1257 = vst.msk [vmem:[#allocation4 + $0x8] sm:$0xff] %vm1255, %v1253
        %v1258 = vld [vmem:[#allocation4] sm:$0x1]
        %vm1259 = vcmask 196608
        %1260 = vst.msk [vmem:[#allocation5] sm:$0x1] %vm1259, %v1258
        %v1261 = vld [vmem:[#allocation4 + $0x1] sm:$0x1]
        %1263 = vrot.lane.b32.xlu0 %v1261, 25
        %v1264 = vpop.permute.xlu0 %1263
        %vm1266 = vcmask 401608
        %1267 = vst.msk [vmem:[#allocation5] sm:$0x1] %vm1266, %v1264
        %v1268 = vld [vmem:[#allocation4 + $0x2] sm:$0x1]
        %1270 = vrot.lane.b32.xlu0 %v1268, 50
        %v1271 = vpop.permute.xlu0 %1270
        %vm1273 = vcmask 606608
        %1274 = vst.msk [vmem:[#allocation5] sm:$0x1] %vm1273, %v1271
        %v1275 = vld [vmem:[#allocation4 + $0x3] sm:$0x1]
        %1277 = vrot.lane.b32.xlu0 %v1275, 75
        %v1278 = vpop.permute.xlu0 %1277
        %vm1280 = vcmask 811608
        %1281 = vst.msk [vmem:[#allocation5] sm:$0x1] %vm1280, %v1278
        %v1282 = vld [vmem:[#allocation4 + $0x4] sm:$0x1]
        %1284 = vrot.lane.b32.xlu0 %v1282, 100
        %v1285 = vpop.permute.xlu0 %1284
        %vm1287 = vcmask 1016608
        %1288 = vst.msk [vmem:[#allocation5] sm:$0x1] %vm1287, %v1285
        %v1289 = vld [vmem:[#allocation4 + $0x5] sm:$0x1]
        %1291 = vrot.lane.b32.xlu0 %v1289, 125
        %v1292 = vpop.permute.xlu0 %1291
        %vm1294 = vcmask 1041384
        %1295 = vst.msk [vmem:[#allocation5] sm:$0x1] %vm1294, %v1292
        %vm1296 = vcmask 172032
        %1297 = vst.msk [vmem:[#allocation5 + $0x8] sm:$0x1] %vm1296, %v1292
        %v1298 = vld [vmem:[#allocation4 + $0x6] sm:$0x1]
        %1300 = vrot.lane.b32.xlu0 %v1298, 22
        %v1301 = vpop.permute.xlu0 %1300
        %vm1303 = vcmask 377008
        %1304 = vst.msk [vmem:[#allocation5 + $0x8] sm:$0x1] %vm1303, %v1301
        %v1305 = vld [vmem:[#allocation4 + $0x7] sm:$0x1]
        %1307 = vrot.lane.b32.xlu0 %v1305, 47
        %v1308 = vpop.permute.xlu0 %1307
        %vm1310 = vcmask 582008
        %1311 = vst.msk [vmem:[#allocation5 + $0x8] sm:$0x1] %vm1310, %v1308
        %v1312 = vld [vmem:[#allocation4 + $0x8] sm:$0x1]
        %1314 = vrot.lane.b32.xlu0 %v1312, 72
        %v1315 = vpop.permute.xlu0 %1314
        %vm1317 = vcmask 787008
        %1318 = vst.msk [vmem:[#allocation5 + $0x8] sm:$0x1] %vm1317, %v1315
        %v1319 = vld [vmem:[#allocation4 + $0x9] sm:$0x1]
        %1321 = vrot.lane.b32.xlu0 %v1319, 97
        %v1322 = vpop.permute.xlu0 %1321
        %vm1324 = vcmask 992008
        %1325 = vst.msk [vmem:[#allocation5 + $0x8] sm:$0x1] %vm1324, %v1322
        %v1326 = vld [vmem:[#allocation4 + $0xa] sm:$0x1]
        %1328 = vrot.lane.b32.xlu0 %v1326, 122
        %v1329 = vpop.permute.xlu0 %1328
        %vm1331 = vcmask 1041360
        %1332 = vst.msk [vmem:[#allocation5 + $0x8] sm:$0x1] %vm1331, %v1329
        %vm1333 = vcmask 147456
        %1334 = vst.msk [vmem:[#allocation5 + $0x10] sm:$0x1] %vm1333, %v1329
        %v1335 = vld [vmem:[#allocation4 + $0xb] sm:$0x1]
        %1337 = vrot.lane.b32.xlu0 %v1335, 19
        %v1338 = vpop.permute.xlu0 %1337
        %vm1340 = vcmask 352408
        %1341 = vst.msk [vmem:[#allocation5 + $0x10] sm:$0x1] %vm1340, %v1338
        %v1342 = vld [vmem:[#allocation4 + $0xc] sm:$0x1]
        %1344 = vrot.lane.b32.xlu0 %v1342, 44
        %v1345 = vpop.permute.xlu0 %1344
        %vm1347 = vcmask 557408
        %1348 = vst.msk [vmem:[#allocation5 + $0x10] sm:$0x1] %vm1347, %v1345
        %v1349 = vld [vmem:[#allocation4 + $0xd] sm:$0x1]
        %1351 = vrot.lane.b32.xlu0 %v1349, 69
        %v1352 = vpop.permute.xlu0 %1351
        %vm1354 = vcmask 762408
        %1355 = vst.msk [vmem:[#allocation5 + $0x10] sm:$0x1] %vm1354, %v1352
        %v1356 = vld [vmem:[#allocation4 + $0xe] sm:$0x1]
        %1358 = vrot.lane.b32.xlu0 %v1356, 94
        %v1359 = vpop.permute.xlu0 %1358
        %vm1361 = vcmask 967408
        %1362 = vst.msk [vmem:[#allocation5 + $0x10] sm:$0x1] %vm1361, %v1359
        %v1363 = vld [vmem:[#allocation4 + $0xf] sm:$0x1]
        %1365 = vrot.lane.b32.xlu0 %v1363, 119
        %v1366 = vpop.permute.xlu0 %1365
        %vm1368 = vcmask 1041336
        %1369 = vst.msk [vmem:[#allocation5 + $0x10] sm:$0x1] %vm1368, %v1366
        %vm1370 = vcmask 122880
        %1371 = vst.msk [vmem:[#allocation5 + $0x18] sm:$0x1] %vm1370, %v1366
        %v1372 = vld [vmem:[#allocation5] ss:$8 sm:$0xf]
        %v1373 = vld [vmem:[%s5] sm:$0xf]
        %v1374 = vld [vmem:[%s5 + $0x4] sm:$0xf]
        %v1375 = vld [vmem:[%s5 + $0x8] sm:$0xf]
        %v1376 = vld [vmem:[%s5 + $0xc] sm:$0xf]
        %v1377 = vld [vmem:[%s5 + $0x10] sm:$0xf]
        %v1378 = vld [vmem:[%s5 + $0x14] sm:$0xf]
        %v1379 = vld [vmem:[%s5 + $0x18] sm:$0xf]
        %v1380 = vld [vmem:[%s5 + $0x1c] sm:$0xf]
        %v1381 = vld [vmem:[%s5 + $0x20] sm:$0xf]
        %v1382 = vld [vmem:[%s5 + $0x24] sm:$0xf]
        %v1383 = vld [vmem:[%s5 + $0x28] sm:$0xf]
        %v1384 = vld [vmem:[%s5 + $0x2c] sm:$0xf]
        %v1385 = vld [vmem:[%s5 + $0x30] sm:$0xf]
        %v1386 = vld [vmem:[%s5 + $0x34] sm:$0xf]
        %v1387 = vld [vmem:[%s5 + $0x38] sm:$0xf]
        %v1388 = vld [vmem:[%s5 + $0x3c] sm:$0xf]
        %v1389 = vld [vmem:[%s5 + $0x40] sm:$0xf]
        %v1390 = vld [vmem:[%s5 + $0x44] sm:$0xf]
        %v1391 = vld [vmem:[%s5 + $0x48] sm:$0xf]
        %v1392 = vld [vmem:[%s5 + $0x4c] sm:$0xf]
        %v1393 = vld [vmem:[%s5 + $0x50] sm:$0xf]
        %v1394 = vld [vmem:[%s5 + $0x54] sm:$0xf]
        %v1395 = vld [vmem:[%s5 + $0x58] sm:$0xf]
        %v1396 = vld [vmem:[%s5 + $0x5c] sm:$0xf]
        %v1397 = vld [vmem:[%s5 + $0x60] sm:$0xf]
        %v1398 = vld [vmem:[%s5 + $0x64] sm:$0xf]
        %v1399 = vld [vmem:[%s5 + $0x68] sm:$0xf]
        %v1400 = vld [vmem:[%s5 + $0x6c] sm:$0xf]
        %v1401 = vld [vmem:[%s5 + $0x70] sm:$0xf]
        %v1402 = vld [vmem:[%s5 + $0x74] sm:$0xf]
        %v1403 = vld [vmem:[%s5 + $0x78] sm:$0xf]
        %v1404 = vld [vmem:[%s5 + $0x7c] sm:$0xf]
        %v1405 = vld [vmem:[%s5 + $0x80] sm:$0xf]
        %v1406 = vld [vmem:[%s5 + $0x84] sm:$0xf]
        %v1407 = vld [vmem:[%s5 + $0x88] sm:$0xf]
        %v1408 = vld [vmem:[%s5 + $0x8c] sm:$0xf]
        %v1409 = vld [vmem:[%s5 + $0x90] sm:$0xf]
        %v1410 = vld [vmem:[%s5 + $0x94] sm:$0xf]
        %v1411 = vld [vmem:[%s5 + $0x98] sm:$0xf]
        %v1412 = vld [vmem:[%s5 + $0x9c] sm:$0xf]
        %v1413 = vld [vmem:[%s5 + $0xa0] sm:$0xf]
        %v1414 = vld [vmem:[%s5 + $0xa4] sm:$0xf]
        %v1415 = vld [vmem:[%s5 + $0xa8] sm:$0xf]
        %v1416 = vld [vmem:[%s5 + $0xac] sm:$0xf]
        %v1417 = vld [vmem:[%s5 + $0xb0] sm:$0xf]
        %v1418 = vld [vmem:[%s5 + $0xb4] sm:$0xf]
        %v1419 = vld [vmem:[%s5 + $0xb8] sm:$0xf]
        %v1420 = vld [vmem:[%s5 + $0xbc] sm:$0xf]
        %v1421 = vld [vmem:[%s5 + $0xc0] sm:$0xf]
        %v1422 = vld [vmem:[%s5 + $0xc4] sm:$0xf]
        %v1423 = vunpack.c.l.bf16 %v1373
        %v1424 = vunpack.c.l.bf16 %v1374
        %v1425 = vunpack.c.l.bf16 %v1375
        %v1426 = vunpack.c.l.bf16 %v1376
        %v1427 = vunpack.c.l.bf16 %v1377
        %v1428 = vunpack.c.l.bf16 %v1378
        %v1429 = vunpack.c.l.bf16 %v1379
        %v1430 = vunpack.c.l.bf16 %v1380
        %v1431 = vunpack.c.l.bf16 %v1381
        %v1432 = vunpack.c.l.bf16 %v1382
        %v1433 = vunpack.c.l.bf16 %v1383
        %v1434 = vunpack.c.l.bf16 %v1384
        %v1435 = vunpack.c.l.bf16 %v1385
        %v1436 = vunpack.c.l.bf16 %v1386
        %v1437 = vunpack.c.l.bf16 %v1387
        %v1438 = vunpack.c.l.bf16 %v1388
        %v1439 = vunpack.c.l.bf16 %v1389
        %v1440 = vunpack.c.l.bf16 %v1390
        %v1441 = vunpack.c.l.bf16 %v1391
        %v1442 = vunpack.c.l.bf16 %v1392
        %v1443 = vunpack.c.l.bf16 %v1393
        %v1444 = vunpack.c.l.bf16 %v1394
        %v1445 = vunpack.c.l.bf16 %v1395
        %v1446 = vunpack.c.l.bf16 %v1396
        %v1447 = vunpack.c.l.bf16 %v1397
        %v1448 = vunpack.c.l.bf16 %v1398
        %v1449 = vunpack.c.l.bf16 %v1399
        %v1450 = vunpack.c.l.bf16 %v1400
        %v1451 = vunpack.c.l.bf16 %v1401
        %v1452 = vunpack.c.l.bf16 %v1402
        %v1453 = vunpack.c.l.bf16 %v1403
        %v1454 = vunpack.c.l.bf16 %v1404
        %v1455 = vunpack.c.l.bf16 %v1405
        %v1456 = vunpack.c.l.bf16 %v1406
        %v1457 = vunpack.c.l.bf16 %v1407
        %v1458 = vunpack.c.l.bf16 %v1408
        %v1459 = vunpack.c.l.bf16 %v1409
        %v1460 = vunpack.c.l.bf16 %v1410
        %v1461 = vunpack.c.l.bf16 %v1411
        %v1462 = vunpack.c.l.bf16 %v1412
        %v1463 = vunpack.c.l.bf16 %v1413
        %v1464 = vunpack.c.l.bf16 %v1414
        %v1465 = vunpack.c.l.bf16 %v1415
        %v1466 = vunpack.c.l.bf16 %v1416
        %v1467 = vunpack.c.l.bf16 %v1417
        %v1468 = vunpack.c.l.bf16 %v1418
        %v1469 = vunpack.c.l.bf16 %v1419
        %v1470 = vunpack.c.l.bf16 %v1420
        %v1471 = vunpack.c.l.bf16 %v1421
        %v1472 = vunpack.c.l.bf16 %v1422
        %v1473 = vld [vmem:[%s6] sm:$0x1]
        %v1475 = vperm.slane %v1372, 0
        %v1476 = vperm.slane %v1372, 1
        %v1477 = vperm.slane %v1372, 2
        %v1478 = vperm.slane %v1372, 3
        %vm1482 = vcmask 130048
        %v1483 = vsel %vm1482, %v1478, 0
        %1485 = vmatpush.msra.mxu0 %v1438
        %1486 = vmatpush.msra.mxu0 %v1437
        %1487 = vmatpush.msra.mxu0 %v1436
        %1488 = vmatpush.msra.mxu0 %v1435
        %1489 = vmatpush.msra.mxu0 %v1434
        %1490 = vmatpush.msra.mxu0 %v1433
        %1491 = vmatpush.msra.mxu0 %v1432
        %1492 = vmatpush.msra.mxu0 %v1431
        %1493 = vmatpush.msra.mxu0 %v1430
        %1494 = vmatpush.msra.mxu0 %v1429
        %1495 = vmatpush.msra.mxu0 %v1428
        %1496 = vmatpush.msra.mxu0 %v1427
        %1497 = vmatpush.msra.mxu0 %v1426
        %1498 = vmatpush.msra.mxu0 %v1425
        %1499 = vmatpush.msra.mxu0 %v1424
        %1500 = vmatpush.msra.mxu0 %v1423
        %1501 = vmatmul.f32.gmra.mxu0 %v1475
        %v1502 = vpop.f32.mrf.mxu0
        %v1503 = vadd.f32 %v1473, %v1502
        %1504 = vdwg.mxu0
        %1505 = vmatpush.msra.mxu0 %v1454
        %1506 = vmatpush.msra.mxu0 %v1453
        %1507 = vmatpush.msra.mxu0 %v1452
        %1508 = vmatpush.msra.mxu0 %v1451
        %1509 = vmatpush.msra.mxu0 %v1450
        %1510 = vmatpush.msra.mxu0 %v1449
        %1511 = vmatpush.msra.mxu0 %v1448
        %1512 = vmatpush.msra.mxu0 %v1447
        %1513 = vmatpush.msra.mxu0 %v1446
        %1514 = vmatpush.msra.mxu0 %v1445
        %1515 = vmatpush.msra.mxu0 %v1444
        %1516 = vmatpush.msra.mxu0 %v1443
        %1517 = vmatpush.msra.mxu0 %v1442
        %1518 = vmatpush.msra.mxu0 %v1441
        %1519 = vmatpush.msra.mxu0 %v1440
        %1520 = vmatpush.msra.mxu0 %v1439
        %1521 = vmatmul.f32.gmra.mxu0 %v1476
        %v1522 = vpop.f32.mrf.mxu0
        %v1523 = vadd.f32 %v1503, %v1522
        %1524 = vdwg.mxu0
        %1525 = vmatpush.msra.mxu0 %v1470
        %1526 = vmatpush.msra.mxu0 %v1469
        %1527 = vmatpush.msra.mxu0 %v1468
        %1528 = vmatpush.msra.mxu0 %v1467
        %1529 = vmatpush.msra.mxu0 %v1466
        %1530 = vmatpush.msra.mxu0 %v1465
        %1531 = vmatpush.msra.mxu0 %v1464
        %1532 = vmatpush.msra.mxu0 %v1463
        %1533 = vmatpush.msra.mxu0 %v1462
        %1534 = vmatpush.msra.mxu0 %v1461
        %1535 = vmatpush.msra.mxu0 %v1460
        %1536 = vmatpush.msra.mxu0 %v1459
        %1537 = vmatpush.msra.mxu0 %v1458
        %1538 = vmatpush.msra.mxu0 %v1457
        %1539 = vmatpush.msra.mxu0 %v1456
        %1540 = vmatpush.msra.mxu0 %v1455
        %1541 = vmatmul.f32.gmra.mxu0 %v1477
        %v1542 = vpop.f32.mrf.mxu0
        %v1543 = vadd.f32 %v1523, %v1542
        %1544 = vdwg.mxu0
        %1545 = vmatpush.msra.mxu0 0.0
        %1546 = vmatpush.msra.mxu0 0.0
        %1547 = vmatpush.msra.mxu0 0.0
        %1548 = vmatpush.msra.mxu0 0.0
        %1549 = vmatpush.msra.mxu0 0.0
        %1550 = vmatpush.msra.mxu0 0.0
        %1551 = vmatpush.msra.mxu0 0.0
        %1552 = vmatpush.msra.mxu0 0.0
        %1553 = vmatpush.msra.mxu0 0.0
        %1554 = vmatpush.msra.mxu0 0.0
        %1555 = vmatpush.msra.mxu0 0.0
        %1556 = vmatpush.msra.mxu0 0.0
        %1557 = vmatpush.msra.mxu0 0.0
        %1558 = vmatpush.msra.mxu0 0.0
        %1559 = vmatpush.msra.mxu0 %v1472
        %1560 = vmatpush.msra.mxu0 %v1471
        %1561 = vmatmul.f32.gmra.mxu0 %v1483
        %v1562 = vpop.f32.mrf.mxu0
        %v1563 = vadd.f32 %v1543, %v1562
        %1564 = vdwg.mxu0
        %v1565 = vmax.f32 %v1563, 0.0
        %v1566 = vld [vmem:[%s7] sm:$0xf]
        %v1567 = vld [vmem:[%s7 + $0x4] sm:$0xf]
        %v1568 = vld [vmem:[%s7 + $0x8] sm:$0xf]
        %v1569 = vld [vmem:[%s7 + $0xc] sm:$0xf]
        %v1570 = vld [vmem:[%s7 + $0x10] sm:$0xf]
        %v1571 = vld [vmem:[%s7 + $0x14] sm:$0xf]
        %v1572 = vld [vmem:[%s7 + $0x18] sm:$0xf]
        %v1573 = vld [vmem:[%s7 + $0x1c] sm:$0xf]
        %v1574 = vld [vmem:[%s7 + $0x20] sm:$0xf]
        %v1575 = vld [vmem:[%s7 + $0x24] sm:$0xf]
        %v1576 = vld [vmem:[%s7 + $0x28] sm:$0xf]
        %v1577 = vld [vmem:[%s7 + $0x2c] sm:$0xf]
        %v1578 = vld [vmem:[%s7 + $0x30] sm:$0xf]
        %v1579 = vld [vmem:[%s7 + $0x34] sm:$0xf]
        %v1580 = vld [vmem:[%s7 + $0x38] sm:$0xf]
        %v1581 = vunpack.c.l.bf16 %v1566
        %v1582 = vunpack.c.l.bf16 %v1567
        %v1583 = vunpack.c.l.bf16 %v1568
        %v1584 = vunpack.c.l.bf16 %v1569
        %v1585 = vunpack.c.l.bf16 %v1570
        %v1586 = vunpack.c.l.bf16 %v1571
        %v1587 = vunpack.c.l.bf16 %v1572
        %v1588 = vunpack.c.l.bf16 %v1573
        %v1589 = vunpack.c.l.bf16 %v1574
        %v1590 = vunpack.c.l.bf16 %v1575
        %v1591 = vunpack.c.l.bf16 %v1576
        %v1592 = vunpack.c.l.bf16 %v1577
        %v1593 = vunpack.c.l.bf16 %v1578
        %v1594 = vunpack.c.l.bf16 %v1579
        %v1595 = vunpack.c.l.bf16 %v1580
        %v1596 = vld [vmem:[%s8] sm:$0x1]
        %vm1597 = vcmask 982016
        %v1599 = vsel %vm1597, %v1565, 0
        %1601 = vmatpush.msra.mxu0 0.0
        %1602 = vmatpush.msra.mxu0 %v1595
        %1603 = vmatpush.msra.mxu0 %v1594
        %1604 = vmatpush.msra.mxu0 %v1593
        %1605 = vmatpush.msra.mxu0 %v1592
        %1606 = vmatpush.msra.mxu0 %v1591
        %1607 = vmatpush.msra.mxu0 %v1590
        %1608 = vmatpush.msra.mxu0 %v1589
        %1609 = vmatpush.msra.mxu0 %v1588
        %1610 = vmatpush.msra.mxu0 %v1587
        %1611 = vmatpush.msra.mxu0 %v1586
        %1612 = vmatpush.msra.mxu0 %v1585
        %1613 = vmatpush.msra.mxu0 %v1584
        %1614 = vmatpush.msra.mxu0 %v1583
        %1615 = vmatpush.msra.mxu0 %v1582
        %1616 = vmatpush.msra.mxu0 %v1581
        %1617 = vmatmul.f32.gmra.mxu0 %v1599
        %v1618 = vpop.f32.mrf.mxu0
        %v1619 = vadd.f32 %v1596, %v1618
        %1620 = vdwg.mxu0
        %v1621 = vmax.f32 %v1619, 0.0
        %v1622 = vld [vmem:[%s9] sm:$0xf]
        %v1623 = vld [vmem:[%s9 + $0x4] sm:$0xf]
        %v1624 = vld [vmem:[%s9 + $0x8] sm:$0xf]
        %v1625 = vld [vmem:[%s9 + $0xc] sm:$0xf]
        %v1626 = vld [vmem:[%s9 + $0x10] sm:$0xf]
        %v1627 = vld [vmem:[%s9 + $0x14] sm:$0xf]
        %v1628 = vld [vmem:[%s9 + $0x18] sm:$0xf]
        %v1629 = vld [vmem:[%s9 + $0x1c] sm:$0xf]
        %v1630 = vld [vmem:[%s9 + $0x20] sm:$0xf]
        %v1631 = vld [vmem:[%s9 + $0x24] sm:$0xf]
        %v1632 = vld [vmem:[%s9 + $0x28] sm:$0x3]
        %v1633 = vunpack.c.l.bf16 %v1622
        %v1634 = vunpack.c.l.bf16 %v1623
        %v1635 = vunpack.c.l.bf16 %v1624
        %v1636 = vunpack.c.l.bf16 %v1625
        %v1637 = vunpack.c.l.bf16 %v1626
        %v1638 = vunpack.c.l.bf16 %v1627
        %v1639 = vunpack.c.l.bf16 %v1628
        %v1640 = vunpack.c.l.bf16 %v1629
        %v1641 = vunpack.c.l.bf16 %v1630
        %v1642 = vunpack.c.l.bf16 %v1631
        %v1643 = vunpack.c.l.bf16 %v1632
        %v1644 = vld [vmem:[%s10] sm:$0x1]
        %vm1645 = vcmask 687104
        %v1647 = vsel %vm1645, %v1621, 0
        %vm1649 = vcmask 1043456
        %v1651 = vsel %vm1649, %v1643, 0
        %1653 = vmatpush.msra.mxu0 0.0
        %1654 = vmatpush.msra.mxu0 0.0
        %1655 = vmatpush.msra.mxu0 0.0
        %1656 = vmatpush.msra.mxu0 0.0
        %1657 = vmatpush.msra.mxu0 0.0
        %1658 = vmatpush.msra.mxu0 %v1651
        %1659 = vmatpush.msra.mxu0 %v1642
        %1660 = vmatpush.msra.mxu0 %v1641
        %1661 = vmatpush.msra.mxu0 %v1640
        %1662 = vmatpush.msra.mxu0 %v1639
        %1663 = vmatpush.msra.mxu0 %v1638
        %1664 = vmatpush.msra.mxu0 %v1637
        %1665 = vmatpush.msra.mxu0 %v1636
        %1666 = vmatpush.msra.mxu0 %v1635
        %1667 = vmatpush.msra.mxu0 %v1634
        %1668 = vmatpush.msra.mxu0 %v1633
        %1669 = vmatmul.f32.gmra.mxu0 %v1647
        %v1670 = vpop.f32.mrf.mxu0
        %v1671 = vadd.f32 %v1644, %v1670
        %1672 = vdwg.mxu0
        %vm1673 = vcmask 73728
        %1674 = vst.msk [vmem:[%s378] sm:$0x1] %vm1673, %v1671
        %s1675 = sand.u32 %s269, 1
        %s1676 = scalar_lea.sflag [#allocation7], %s1675
        %s1677 = sand.u32 %s269, 1
        %s1678 = scalar_lea.vmem [#allocation6], %s1677
        // Predicated region
        $region65: #{lenet_forward.1} parent=63 // pred_check
          %p1679 = pneg %p279
        $region66: #{lenet_forward.1} parent=63 // pred_check_branch
          %1681 = sbr.rel (%p1679) target = $region68
        $region67: #{lenet_forward.1} parent=63 // pred_region
          %1683 = vsyncadd %s1676, 0
          %s1684 = scalar_lea.hbm %s11, %s25
          %s1686 = sshll.u32 %s1678, 4
          %s1687 = int_to_ptr.vmem [resolvable:$true] %s1686
          %s1688 = sshll.u32 %s1684, 4
          %s1689 = int_to_ptr.hbm [resolvable:$true] %s1688
          %1691 = dma.vmem_to_hbm [thread:$0]  %s1687, 16, %s1689, %s1676
        $region68: #{lenet_forward.1} parent=63 // pred_fallthru
          _
      $region64: #{lenet_forward.1} parent=5 // pred_fallthru
        _
      %p1692 = scmp.le.s32.totalorder 2, %s20
      // Predicated region
      $region69: #{lenet_forward.1} parent=5 // pred_check
        %p1693 = pneg %p1692
      $region70: #{lenet_forward.1} parent=5 // pred_check_branch
        %1695 = sbr.rel (%p1693) target = $region72
      $region71: #{lenet_forward.1} parent=5 // pred_region
        %s1696 = ssub.s32 %s20, 2
        // Predicated region
        $region73: #{lenet_forward.1} parent=71 // pred_check
          %p1697 = pneg %p285
        $region74: #{lenet_forward.1} parent=71 // pred_check_branch
          %1699 = sbr.rel (%p1697) target = $region76
        $region75: #{lenet_forward.1} parent=71 // pred_region
          %s1700 = sand.u32 %s270, 1
          %s1701 = scalar_lea.sflag [#allocation7], %s1700
          %s1702 = sand.u32 %s270, 1
          %s1703 = scalar_lea.vmem [#allocation6], %s1702
          %1705 = dma.done %s1701, 16
        $region76: #{lenet_forward.1} parent=71 // pred_fallthru
          _
      $region72: #{lenet_forward.1} parent=5 // pred_fallthru
        _
    $region6: #{lenet_forward.1} parent=1 // loop_footer
      %s24 = sadd.s32 1, %s20
    $region7: #{lenet_forward.1} parent=1 // loop_footer_branch
      %19 = sbr.rel target = $region3
    $region8: #{lenet_forward.1} parent=1 // loop_exit
      _
    %1706 = vsyncpa [#allocation7], 1
    %s1707 = scalar_lea.sflag [#allocation7], 1
    %1708 = vsyncpa %s1707, 1

</llo_original>
